<compile_context>
chip_gen: v7x
topology: tpu7x:2x2x1
jax: 0.10.0
libtpu: 0.0.40
codegen_flags: <defaults>
</compile_context>

<pallas_src>
import math
from functools import lru_cache

import numpy as np
import jax
import jax.numpy as jnp
from jax import lax
from jax.experimental import pallas as pl
from jax.experimental.pallas import tpu as pltpu


def _round_up(v, m):
    return (v + m - 1) // m * m


@lru_cache(maxsize=None)
def _dft_operators(H, W):
    """Dense ortho rfft2 analysis / irfft2 synthesis operators, stacked + padded.

    Returns:
      a_cat: (2*K2p, N) bf16  rows [0:K2) = A_r, rows [K2p:K2p+K2) = A_i
      s_cat: (N, 2*K2p) bf16  cols [0:K2) = S_r, cols [K2p:K2p+K2) = S_i
      K2, K2p
    Flattening: n = h*W + w (matches x.view(B,H,W,C)),
                kf = kh*Kw + kw (matches complex_weight.reshape(H*Kw, C)).
    """
    Kw = W // 2 + 1
    N = H * W
    K2 = H * Kw
    K2p = _round_up(K2, 128)   # pad each half to an MXU/tile-aligned multiple of 128

    hh = np.arange(H, dtype=np.float64)
    ww = np.arange(W, dtype=np.float64)
    kh = np.arange(H, dtype=np.float64)
    kw = np.arange(Kw, dtype=np.float64)
    # ang[h, w, kh, kw] = 2*pi*(h*kh/H + w*kw/W)
    ang = 2.0 * np.pi * (hh[:, None, None, None] * kh[None, None, :, None] / H
                         + ww[None, :, None, None] * kw[None, None, None, :] / W)
    scale = 1.0 / math.sqrt(H * W)
    cos = np.cos(ang) * scale                       # (H, W, H, Kw)
    sin = np.sin(ang) * scale

    # Forward rfft2 (ortho):  Y = (A_r + i*A_i) @ x,  A: (K2, N)
    a_r = cos.reshape(N, K2).T
    a_i = (-sin).reshape(N, K2).T

    # irfft2 (ortho, real): out[n] = sum_kf alpha_kw * (Zr*cos - Zi*sin)[n, kf]
    # alpha doubles interior half-spectrum bins; sin vanishes at kw=0 / Nyquist.
    idx = np.arange(Kw)
    edge = idx == 0
    if W % 2 == 0:
        edge |= idx == W // 2
    alpha = np.where(edge, 1.0, 2.0)
    s_r = (cos * alpha[None, None, None, :]).reshape(N, K2)
    s_i = (-sin * alpha[None, None, None, :]).reshape(N, K2)

    a_cat = np.zeros((2 * K2p, N), np.float32)
    a_cat[:K2] = a_r
    a_cat[K2p:K2p + K2] = a_i
    s_cat = np.zeros((N, 2 * K2p), np.float32)
    s_cat[:, :K2] = s_r
    s_cat[:, K2p:K2p + K2] = s_i
    return (jnp.asarray(a_cat, jnp.bfloat16),
            jnp.asarray(s_cat, jnp.bfloat16),
            K2, K2p)


def _global_filter_kernel(x_ref, a_ref, s_ref, wa_ref, wb_ref, o_ref):
    # x_ref : (TB, N, C)       activations (bf16 or f32)
    # a_ref : (2*K2p, N) bf16  stacked analysis operator [A_r; A_i]
    # s_ref : (N, 2*K2p) bf16  stacked synthesis operator [S_r | S_i]
    # wa_ref, wb_ref : (2*K2p, C) f32  filter weights [wr; wr], [-wi; wi]
    # o_ref : (TB, N, C) f32
    a_cat = a_ref[...]
    s_cat = s_ref[...]
    wa = wa_ref[...]
    wb = wb_ref[...]
    tb = x_ref.shape[0]
    k2p = wa.shape[0] // 2

    def body(t, carry):
        xb = x_ref[t].astype(jnp.bfloat16)                               # (N, C)
        # Forward rfft2: Y = [Yr; Yi], one (2*K2p, N) x (N, C) MXU matmul.
        y = jnp.dot(a_cat, xb, preferred_element_type=jnp.float32)       # (2K2p, C)
        # Complex multiply: Z = [Zr; Zi] = Y*[wr;wr] + swap_halves(Y)*[-wi;wi]
        # (half-swap = sublane roll by K2p -> XLU slot, off the VALU path).
        z = y * wa + pltpu.roll(y, k2p, axis=0) * wb
        # Real irfft2: one (N, 2*K2p) x (2*K2p, C) MXU matmul.
        out = jnp.dot(s_cat, z.astype(jnp.bfloat16),
                      preferred_element_type=jnp.float32)                # (N, C)
        o_ref[t] = out.astype(o_ref.dtype)
        return carry

    lax.fori_loop(0, tb, body, 0, unroll=True)


def _pick_tb(B):
    # Largest TB in {8,4,2} dividing B that still leaves grid >= 2 steps
    # (keeps both v7x TensorCores busy); otherwise one image per step.
    for cand in (8, 4, 2):
        if B % cand == 0 and B // cand >= 2:
            return cand
    return 1


def global_filter_forward(x, complex_weight):
    """x: (B, N, C) float (bf16/f32), complex_weight: (H, W//2+1, C, 2) -> (B, N, C) f32."""
    B, N, C = x.shape
    H = int(round(math.sqrt(N)))
    W = H
    assert H * W == N, "sequence length must be a perfect square"
    Kw = W // 2 + 1
    assert complex_weight.shape == (H, Kw, C, 2), complex_weight.shape

    a_cat, s_cat, K2, K2p = _dft_operators(H, W)

    # Filter weights, zero-padded to K2p rows and stacked to match the stacked
    # operators.  Kept f32 so the elementwise complex multiply stays full
    # precision (matching torch's f32 path).
    w_r = complex_weight[..., 0].reshape(K2, C).astype(jnp.float32)
    w_i = complex_weight[..., 1].reshape(K2, C).astype(jnp.float32)
    pad = ((0, K2p - K2), (0, 0))
    w_r = jnp.pad(w_r, pad)
    w_i = jnp.pad(w_i, pad)
    wa = jnp.concatenate([w_r, w_r], axis=0)          # (2*K2p, C)
    wb = jnp.concatenate([-w_i, w_i], axis=0)         # (2*K2p, C)

    TB = _pick_tb(B)
    grid = (B // TB,)

    # Grid-invariant operands: index_map (0, 0) -> fetched once, VMEM-resident.
    spec_a = pl.BlockSpec((2 * K2p, N), lambda b: (0, 0))
    spec_s = pl.BlockSpec((N, 2 * K2p), lambda b: (0, 0))
    spec_w = pl.BlockSpec((2 * K2p, C), lambda b: (0, 0))

    # VMEM budget: double-buffered activation blocks + (double-buffer-allocated)
    # constants + headroom for Mosaic scratch, capped under v7x's 64 MiB/TC.
    bytes_act = 2 * TB * N * C * (x.dtype.itemsize + 4)        # x block + f32 out block
    bytes_const = 2 * (a_cat.size * 2 + s_cat.size * 2 + 2 * (2 * K2p) * C * 4)
    vmem_limit = int(min(bytes_act + bytes_const + (16 << 20), 48 << 20))

    return pl.pallas_call(
        _global_filter_kernel,
        out_shape=jax.ShapeDtypeStruct((B, N, C), jnp.float32),
        grid_spec=pltpu.PrefetchScalarGridSpec(
            num_scalar_prefetch=0,
            grid=grid,
            in_specs=[
                pl.BlockSpec((TB, N, C), lambda b: (b, 0, 0)),
                spec_a, spec_s, spec_w, spec_w,
            ],
            out_specs=pl.BlockSpec((TB, N, C), lambda b: (b, 0, 0)),
        ),
        compiler_params=pltpu.CompilerParams(
            dimension_semantics=("parallel",),
            vmem_limit_bytes=vmem_limit,
        ),
    )(x, a_cat, s_cat, wa, wb)


def global_filter_reference(x, complex_weight):
    """Pure-JAX reference mirroring the torch module exactly (jnp.fft)."""
    B, N, C = x.shape
    H = W = int(round(math.sqrt(N)))
    xi = x.reshape(B, H, W, C).astype(jnp.float32)
    xf = jnp.fft.rfft2(xi, axes=(1, 2), norm="ortho")
    wc = (complex_weight[..., 0] + 1j * complex_weight[..., 1]).astype(jnp.complex64)
    xf = xf * wc[None]
    xo = jnp.fft.irfft2(xf, s=(H, W), axes=(1, 2), norm="ortho")
    return xo.reshape(B, N, C)


if __name__ == "__main__":
    # Module defaults: h=14, w=8 -> H = W = 14, N = 196.  Small batch/channels;
    # C = 128 keeps the f32 output stores lane-dense (real GFNet dims are
    # 256/384/512), B = 8 with TB = 4 gives a 2-step parallel grid.
    B, dim = 8, 128
    h_freq, w_freq = 14, 8
    H = h_freq
    W = 2 * (w_freq - 1)          # 14
    N = H * W                     # 196

    key = jax.random.PRNGKey(0)
    kx, kw_ = jax.random.split(key)
    # Feed activations in bf16 (no host-side f32 upcast); kernel accumulates f32.
    x = jax.random.normal(kx, (B, N, dim), dtype=jnp.float32).astype(jnp.bfloat16)
    complex_weight = jax.random.normal(
        kw_, (h_freq, w_freq, dim, 2), dtype=jnp.float32) * 0.5

    gf = jax.jit(global_filter_forward)   # hoists constant construction off the hot path
    out = jax.block_until_ready(gf(x, complex_weight))

    ref = global_filter_reference(x, complex_weight)
    assert out.shape == (B, N, dim), out.shape
    assert out.dtype == jnp.float32, out.dtype
    # Relative-L2 check: structural errors would be O(1); tolerance covers the
    # bf16 operand rounding of the MXU path.
    rel_err = float(jnp.linalg.norm(out - ref) / jnp.linalg.norm(ref))
    assert rel_err < 1e-2, f"mismatch vs reference, relative L2 error {rel_err}"

    print("KERNEL_OK")
</pallas_src>

<mosaic_0001>
module attributes {stable_mosaic.version = 11 : i64} {
  func.func @_global_filter_kernel(%arg0: i32, %arg1: memref<4x196x128xbf16, #tpu.memory_space<vmem>>, %arg2: memref<256x196xbf16, #tpu.memory_space<vmem>>, %arg3: memref<196x256xbf16, #tpu.memory_space<vmem>>, %arg4: memref<256x128xf32, #tpu.memory_space<vmem>>, %arg5: memref<256x128xf32, #tpu.memory_space<vmem>>, %arg6: memref<4x196x128xf32, #tpu.memory_space<vmem>>) attributes {dimension_semantics = [#tpu.dimension_semantics<parallel>], iteration_bounds = array<i64: 2>, scalar_prefetch = 0 : i64, scratch_operands = 0 : i64, tpu.core_type = #tpu.core_type<tc>, window_params = [{transform_indices = @transform_0, window_bounds = array<i64: 4, 196, 128>}, {pipeline_mode = #tpu.pipeline_mode<synchronous>, transform_indices = @transform_1, window_bounds = array<i64: 256, 196>}, {pipeline_mode = #tpu.pipeline_mode<synchronous>, transform_indices = @transform_2, window_bounds = array<i64: 196, 256>}, {pipeline_mode = #tpu.pipeline_mode<synchronous>, transform_indices = @transform_3, window_bounds = array<i64: 256, 128>}, {pipeline_mode = #tpu.pipeline_mode<synchronous>, transform_indices = @transform_4, window_bounds = array<i64: 256, 128>}, {transform_indices = @transform_5, window_bounds = array<i64: 4, 196, 128>}]} {
    %c0 = arith.constant 0 : index
    %c0_0 = arith.constant 0 : index
    %0 = vector.load %arg2[%c0, %c0_0] : memref<256x196xbf16, #tpu.memory_space<vmem>>, vector<256x196xbf16>
    %c0_1 = arith.constant 0 : index
    %c0_2 = arith.constant 0 : index
    %1 = vector.load %arg3[%c0_1, %c0_2] : memref<196x256xbf16, #tpu.memory_space<vmem>>, vector<196x256xbf16>
    %c0_3 = arith.constant 0 : index
    %c0_4 = arith.constant 0 : index
    %2 = vector.load %arg4[%c0_3, %c0_4] : memref<256x128xf32, #tpu.memory_space<vmem>>, vector<256x128xf32>
    %c0_5 = arith.constant 0 : index
    %c0_6 = arith.constant 0 : index
    %3 = vector.load %arg5[%c0_5, %c0_6] : memref<256x128xf32, #tpu.memory_space<vmem>>, vector<256x128xf32>
    %c0_i32 = arith.constant 0 : i32
    %4 = arith.index_cast %c0_i32 : i32 to index
    %c0_7 = arith.constant 0 : index
    %c0_8 = arith.constant 0 : index
    %5 = vector.load %arg1[%4, %c0_7, %c0_8] : memref<4x196x128xbf16, #tpu.memory_space<vmem>>, vector<1x196x128xbf16>
    %6 = vector.shape_cast %5 : vector<1x196x128xbf16> to vector<196x128xbf16>
    %cst = arith.constant dense<0.000000e+00> : vector<256x128xf32>
    %7 = tpu.matmul %0, %6, %cst {dimension_numbers = #tpu.dot_dimension_numbers<[1], [0], [0], [1], [0, 0, 1, 1], [], []>} : vector<256x196xbf16>, vector<196x128xbf16>, vector<256x128xf32> -> vector<256x128xf32>
    %8 = arith.mulf %7, %2 : vector<256x128xf32>
    %c128_i32 = arith.constant 128 : i32
    %9 = tpu.dynamic_rotate %7 by %c128_i32 dim 0 : vector<256x128xf32>, i32 -> vector<256x128xf32>
    %10 = arith.mulf %9, %3 : vector<256x128xf32>
    %11 = arith.addf %8, %10 : vector<256x128xf32>
    %12 = arith.truncf %11 : vector<256x128xf32> to vector<256x128xbf16>
    %cst_9 = arith.constant dense<0.000000e+00> : vector<196x128xf32>
    %13 = tpu.matmul %1, %12, %cst_9 {dimension_numbers = #tpu.dot_dimension_numbers<[1], [0], [0], [1], [0, 0, 1, 1], [], []>} : vector<196x256xbf16>, vector<256x128xbf16>, vector<196x128xf32> -> vector<196x128xf32>
    %14 = arith.index_cast %c0_i32 : i32 to index
    %c0_10 = arith.constant 0 : index
    %c0_11 = arith.constant 0 : index
    %15 = vector.load %arg6[%14, %c0_10, %c0_11] : memref<4x196x128xf32, #tpu.memory_space<vmem>>, vector<1x196x128xf32>
    %16 = vector.shape_cast %15 : vector<1x196x128xf32> to vector<196x128xf32>
    %17 = vector.shape_cast %13 : vector<196x128xf32> to vector<1x196x128xf32>
    tpu.vector_store %arg6[%14, %c0_10, %c0_11], %17 {strides = array<i32>} : memref<4x196x128xf32, #tpu.memory_space<vmem>>, vector<1x196x128xf32>,
    %c1_i32 = arith.constant 1 : i32
    %18 = arith.index_cast %c1_i32 : i32 to index
    %c0_12 = arith.constant 0 : index
    %c0_13 = arith.constant 0 : index
    %19 = vector.load %arg1[%18, %c0_12, %c0_13] : memref<4x196x128xbf16, #tpu.memory_space<vmem>>, vector<1x196x128xbf16>
    %20 = vector.shape_cast %19 : vector<1x196x128xbf16> to vector<196x128xbf16>
    %cst_14 = arith.constant dense<0.000000e+00> : vector<256x128xf32>
    %21 = tpu.matmul %0, %20, %cst_14 {dimension_numbers = #tpu.dot_dimension_numbers<[1], [0], [0], [1], [0, 0, 1, 1], [], []>} : vector<256x196xbf16>, vector<196x128xbf16>, vector<256x128xf32> -> vector<256x128xf32>
    %22 = arith.mulf %21, %2 : vector<256x128xf32>
    %c128_i32_15 = arith.constant 128 : i32
    %23 = tpu.dynamic_rotate %21 by %c128_i32_15 dim 0 : vector<256x128xf32>, i32 -> vector<256x128xf32>
    %24 = arith.mulf %23, %3 : vector<256x128xf32>
    %25 = arith.addf %22, %24 : vector<256x128xf32>
    %26 = arith.truncf %25 : vector<256x128xf32> to vector<256x128xbf16>
    %cst_16 = arith.constant dense<0.000000e+00> : vector<196x128xf32>
    %27 = tpu.matmul %1, %26, %cst_16 {dimension_numbers = #tpu.dot_dimension_numbers<[1], [0], [0], [1], [0, 0, 1, 1], [], []>} : vector<196x256xbf16>, vector<256x128xbf16>, vector<196x128xf32> -> vector<196x128xf32>
    %28 = arith.index_cast %c1_i32 : i32 to index
    %c0_17 = arith.constant 0 : index
    %c0_18 = arith.constant 0 : index
    %29 = vector.load %arg6[%28, %c0_17, %c0_18] : memref<4x196x128xf32, #tpu.memory_space<vmem>>, vector<1x196x128xf32>
    %30 = vector.shape_cast %29 : vector<1x196x128xf32> to vector<196x128xf32>
    %31 = vector.shape_cast %27 : vector<196x128xf32> to vector<1x196x128xf32>
    tpu.vector_store %arg6[%28, %c0_17, %c0_18], %31 {strides = array<i32>} : memref<4x196x128xf32, #tpu.memory_space<vmem>>, vector<1x196x128xf32>,
    %c2_i32 = arith.constant 2 : i32
    %32 = arith.index_cast %c2_i32 : i32 to index
    %c0_19 = arith.constant 0 : index
    %c0_20 = arith.constant 0 : index
    %33 = vector.load %arg1[%32, %c0_19, %c0_20] : memref<4x196x128xbf16, #tpu.memory_space<vmem>>, vector<1x196x128xbf16>
    %34 = vector.shape_cast %33 : vector<1x196x128xbf16> to vector<196x128xbf16>
    %cst_21 = arith.constant dense<0.000000e+00> : vector<256x128xf32>
    %35 = tpu.matmul %0, %34, %cst_21 {dimension_numbers = #tpu.dot_dimension_numbers<[1], [0], [0], [1], [0, 0, 1, 1], [], []>} : vector<256x196xbf16>, vector<196x128xbf16>, vector<256x128xf32> -> vector<256x128xf32>
    %36 = arith.mulf %35, %2 : vector<256x128xf32>
    %c128_i32_22 = arith.constant 128 : i32
    %37 = tpu.dynamic_rotate %35 by %c128_i32_22 dim 0 : vector<256x128xf32>, i32 -> vector<256x128xf32>
    %38 = arith.mulf %37, %3 : vector<256x128xf32>
    %39 = arith.addf %36, %38 : vector<256x128xf32>
    %40 = arith.truncf %39 : vector<256x128xf32> to vector<256x128xbf16>
    %cst_23 = arith.constant dense<0.000000e+00> : vector<196x128xf32>
    %41 = tpu.matmul %1, %40, %cst_23 {dimension_numbers = #tpu.dot_dimension_numbers<[1], [0], [0], [1], [0, 0, 1, 1], [], []>} : vector<196x256xbf16>, vector<256x128xbf16>, vector<196x128xf32> -> vector<196x128xf32>
    %42 = arith.index_cast %c2_i32 : i32 to index
    %c0_24 = arith.constant 0 : index
    %c0_25 = arith.constant 0 : index
    %43 = vector.load %arg6[%42, %c0_24, %c0_25] : memref<4x196x128xf32, #tpu.memory_space<vmem>>, vector<1x196x128xf32>
    %44 = vector.shape_cast %43 : vector<1x196x128xf32> to vector<196x128xf32>
    %45 = vector.shape_cast %41 : vector<196x128xf32> to vector<1x196x128xf32>
    tpu.vector_store %arg6[%42, %c0_24, %c0_25], %45 {strides = array<i32>} : memref<4x196x128xf32, #tpu.memory_space<vmem>>, vector<1x196x128xf32>,
    %c3_i32 = arith.constant 3 : i32
    %46 = arith.index_cast %c3_i32 : i32 to index
    %c0_26 = arith.constant 0 : index
    %c0_27 = arith.constant 0 : index
    %47 = vector.load %arg1[%46, %c0_26, %c0_27] : memref<4x196x128xbf16, #tpu.memory_space<vmem>>, vector<1x196x128xbf16>
    %48 = vector.shape_cast %47 : vector<1x196x128xbf16> to vector<196x128xbf16>
    %cst_28 = arith.constant dense<0.000000e+00> : vector<256x128xf32>
    %49 = tpu.matmul %0, %48, %cst_28 {dimension_numbers = #tpu.dot_dimension_numbers<[1], [0], [0], [1], [0, 0, 1, 1], [], []>} : vector<256x196xbf16>, vector<196x128xbf16>, vector<256x128xf32> -> vector<256x128xf32>
    %50 = arith.mulf %49, %2 : vector<256x128xf32>
    %c128_i32_29 = arith.constant 128 : i32
    %51 = tpu.dynamic_rotate %49 by %c128_i32_29 dim 0 : vector<256x128xf32>, i32 -> vector<256x128xf32>
    %52 = arith.mulf %51, %3 : vector<256x128xf32>
    %53 = arith.addf %50, %52 : vector<256x128xf32>
    %54 = arith.truncf %53 : vector<256x128xf32> to vector<256x128xbf16>
    %cst_30 = arith.constant dense<0.000000e+00> : vector<196x128xf32>
    %55 = tpu.matmul %1, %54, %cst_30 {dimension_numbers = #tpu.dot_dimension_numbers<[1], [0], [0], [1], [0, 0, 1, 1], [], []>} : vector<196x256xbf16>, vector<256x128xbf16>, vector<196x128xf32> -> vector<196x128xf32>
    %56 = arith.index_cast %c3_i32 : i32 to index
    %c0_31 = arith.constant 0 : index
    %c0_32 = arith.constant 0 : index
    %57 = vector.load %arg6[%56, %c0_31, %c0_32] : memref<4x196x128xf32, #tpu.memory_space<vmem>>, vector<1x196x128xf32>
    %58 = vector.shape_cast %57 : vector<1x196x128xf32> to vector<196x128xf32>
    %59 = vector.shape_cast %55 : vector<196x128xf32> to vector<1x196x128xf32>
    tpu.vector_store %arg6[%56, %c0_31, %c0_32], %59 {strides = array<i32>} : memref<4x196x128xf32, #tpu.memory_space<vmem>>, vector<1x196x128xf32>,
    %c4_i32 = arith.constant 4 : i32
    return
  }
  func.func @transform_0(%arg0: i32) -> (i32, i32, i32) {
    %c0_i32 = arith.constant 0 : i32
    %c0_i32_0 = arith.constant 0 : i32
    %c0_i32_1 = arith.constant 0 : i32
    return %arg0, %c0_i32, %c0_i32_0 : i32, i32, i32
  }
  func.func @transform_1(%arg0: i32) -> (i32, i32) {
    %c0_i32 = arith.constant 0 : i32
    %c0_i32_0 = arith.constant 0 : i32
    %c0_i32_1 = arith.constant 0 : i32
    return %c0_i32, %c0_i32_0 : i32, i32
  }
  func.func @transform_2(%arg0: i32) -> (i32, i32) {
    %c0_i32 = arith.constant 0 : i32
    %c0_i32_0 = arith.constant 0 : i32
    %c0_i32_1 = arith.constant 0 : i32
    return %c0_i32, %c0_i32_0 : i32, i32
  }
  func.func @transform_3(%arg0: i32) -> (i32, i32) {
    %c0_i32 = arith.constant 0 : i32
    %c0_i32_0 = arith.constant 0 : i32
    %c0_i32_1 = arith.constant 0 : i32
    return %c0_i32, %c0_i32_0 : i32, i32
  }
  func.func @transform_4(%arg0: i32) -> (i32, i32) {
    %c0_i32 = arith.constant 0 : i32
    %c0_i32_0 = arith.constant 0 : i32
    %c0_i32_1 = arith.constant 0 : i32
    return %c0_i32, %c0_i32_0 : i32, i32
  }
  func.func @transform_5(%arg0: i32) -> (i32, i32, i32) {
    %c0_i32 = arith.constant 0 : i32
    %c0_i32_0 = arith.constant 0 : i32
    %c0_i32_1 = arith.constant 0 : i32
    return %arg0, %c0_i32, %c0_i32_0 : i32, i32, i32
  }
}

</mosaic_0001>

<llo_original>
// kernel: global_filter_forward.1
$region0: #{global_filter_forward.1}
  #allocation0 [shape = 'u32[]', space=smem, size = 0x4, offset = 0x4, fixed_abs, tag = 'smem constant byte address 0x4 - core index']
  #allocation1 [shape = 'u32[144,128]{1,0:T(1,128)}', space=vmem, size = 0x12000, scoped, tag = 'internal scratch']
  %s0 = inlined_call_operand.vmem [shape: bf16[8,196,128], index: 0, kind: input, shape index: {}]
  %s1 = inlined_call_operand.vmem [shape: bf16[256,196], index: 1, kind: input, shape index: {}]
  %s2 = inlined_call_operand.vmem [shape: bf16[196,256], index: 2, kind: input, shape index: {}]
  %s3 = inlined_call_operand.vmem [shape: f32[256,128], index: 3, kind: input, shape index: {}]
  %s4 = inlined_call_operand.vmem [shape: f32[256,128], index: 4, kind: input, shape index: {}]
  %s5 = inlined_call_operand.vmem [shape: f32[8,196,128], index: 5, kind: output, shape index: {}]
  %s6 = sld [smem:[#allocation0]]
  $region53: #{global_filter_forward.1} parent=0
    _
  %s8 = ssub.s32 1, %s6
  %s9 = scalar_select 0, %s8, %s6
  loop: start=0, step=1, limit=4
  $region2: #{global_filter_forward.1} parent=0 // loop_pre_header
    _
  $region3: #{global_filter_forward.1} parent=0 // loop_header
    %s11 = sphi 0, %s15
    %p12 = scmp.ge.s32.totalorder %s11, 4
    %s21 = sphi 0, %s23
    %s24 = sphi 0, %s21
    %s25 = sphi 0, %s24
    %s41 = sphi 0, %s25
    %s45 = sphi 0, %s45
    %s47 = sphi 0, %s45
    %s48 = sphi 0, %s47
    %s62 = sphi 0, %s48
    %s66 = sphi 0, %s66
    %s68 = sphi 0, %s66
    %s69 = sphi 0, %s68
    %s83 = sphi 0, %s69
    %s87 = sphi 0, %s87
    %s89 = sphi 0, %s87
    %s90 = sphi 0, %s89
    %s104 = sphi 0, %s90
    %s108 = sphi 0, %s108
    %s110 = sphi 0, %s108
    %s111 = sphi 0, %s110
    %s125 = sphi 0, %s111
    %s131 = sphi 0, %s133
    %s134 = sphi 0, %s131
    %s135 = sphi 0, %s134
    %s151 = sphi 0, %s135
  $region4: #{global_filter_forward.1} parent=0 // loop_header_branch
    %14 = sbr.rel (%p12) target = $region8
  $region5: #{global_filter_forward.1} parent=0 // loop_body
    %s16 = ssub.s32 %s11, 1
    %s17 = ssub.s32 %s11, 2
    %s18 = sadd.s32 %s11, 1
    %s19 = ssub.s32 %s11, %s18
    %p20 = scmp.eq.s32.totalorder %s19, 0
    %s22 = sadd.s32 %s21, 1
    %s23 = scalar_select %p20, %s21, %s22
    %p26 = pneg %p20
    %p27 = scmp.eq.s32.totalorder %s11, 1
    %p28 = por %p26, %p27
    %p29 = scmp.ne.s32.totalorder %s21, %s24
    %p30 = scmp.eq.s32.totalorder %s11, 0
    %p31 = por %p29, %p30
    %p32 = scmp.ne.s32.totalorder %s21, %s24
    %p33 = scmp.eq.s32.totalorder %s16, 1
    %p34 = por %p32, %p33
    %p35 = scmp.ne.s32.totalorder %s24, %s25
    %p36 = scmp.eq.s32.totalorder %s16, 0
    %p37 = por %p35, %p36
    %p38 = scmp.ne.s32.totalorder %s24, %s25
    %p39 = scmp.eq.s32.totalorder %s17, 1
    %p40 = por %p38, %p39
    %p42 = scmp.ne.s32.totalorder %s25, %s41
    %p43 = scmp.eq.s32.totalorder %s17, 0
    %p44 = por %p42, %p43
    %s46 = sadd.s32 %s45, 1
    %p49 = scmp.eq.s32.totalorder %s11, 1
    %p50 = scmp.ne.s32.totalorder %s45, %s47
    %p51 = scmp.eq.s32.totalorder %s11, 0
    %p52 = por %p50, %p51
    %p53 = scmp.ne.s32.totalorder %s45, %s47
    %p54 = scmp.eq.s32.totalorder %s16, 1
    %p55 = por %p53, %p54
    %p56 = scmp.ne.s32.totalorder %s47, %s48
    %p57 = scmp.eq.s32.totalorder %s16, 0
    %p58 = por %p56, %p57
    %p59 = scmp.ne.s32.totalorder %s47, %s48
    %p60 = scmp.eq.s32.totalorder %s17, 1
    %p61 = por %p59, %p60
    %p63 = scmp.ne.s32.totalorder %s48, %s62
    %p64 = scmp.eq.s32.totalorder %s17, 0
    %p65 = por %p63, %p64
    %s67 = sadd.s32 %s66, 1
    %p70 = scmp.eq.s32.totalorder %s11, 1
    %p71 = scmp.ne.s32.totalorder %s66, %s68
    %p72 = scmp.eq.s32.totalorder %s11, 0
    %p73 = por %p71, %p72
    %p74 = scmp.ne.s32.totalorder %s66, %s68
    %p75 = scmp.eq.s32.totalorder %s16, 1
    %p76 = por %p74, %p75
    %p77 = scmp.ne.s32.totalorder %s68, %s69
    %p78 = scmp.eq.s32.totalorder %s16, 0
    %p79 = por %p77, %p78
    %p80 = scmp.ne.s32.totalorder %s68, %s69
    %p81 = scmp.eq.s32.totalorder %s17, 1
    %p82 = por %p80, %p81
    %p84 = scmp.ne.s32.totalorder %s69, %s83
    %p85 = scmp.eq.s32.totalorder %s17, 0
    %p86 = por %p84, %p85
    %s88 = sadd.s32 %s87, 1
    %p91 = scmp.eq.s32.totalorder %s11, 1
    %p92 = scmp.ne.s32.totalorder %s87, %s89
    %p93 = scmp.eq.s32.totalorder %s11, 0
    %p94 = por %p92, %p93
    %p95 = scmp.ne.s32.totalorder %s87, %s89
    %p96 = scmp.eq.s32.totalorder %s16, 1
    %p97 = por %p95, %p96
    %p98 = scmp.ne.s32.totalorder %s89, %s90
    %p99 = scmp.eq.s32.totalorder %s16, 0
    %p100 = por %p98, %p99
    %p101 = scmp.ne.s32.totalorder %s89, %s90
    %p102 = scmp.eq.s32.totalorder %s17, 1
    %p103 = por %p101, %p102
    %p105 = scmp.ne.s32.totalorder %s90, %s104
    %p106 = scmp.eq.s32.totalorder %s17, 0
    %p107 = por %p105, %p106
    %s109 = sadd.s32 %s108, 1
    %p112 = scmp.eq.s32.totalorder %s11, 1
    %p113 = scmp.ne.s32.totalorder %s108, %s110
    %p114 = scmp.eq.s32.totalorder %s11, 0
    %p115 = por %p113, %p114
    %p116 = scmp.ne.s32.totalorder %s108, %s110
    %p117 = scmp.eq.s32.totalorder %s16, 1
    %p118 = por %p116, %p117
    %p119 = scmp.ne.s32.totalorder %s110, %s111
    %p120 = scmp.eq.s32.totalorder %s16, 0
    %p121 = por %p119, %p120
    %p122 = scmp.ne.s32.totalorder %s110, %s111
    %p123 = scmp.eq.s32.totalorder %s17, 1
    %p124 = por %p122, %p123
    %p126 = scmp.ne.s32.totalorder %s111, %s125
    %p127 = scmp.eq.s32.totalorder %s17, 0
    %p128 = por %p126, %p127
    %s129 = ssub.s32 %s11, %s18
    %p130 = scmp.eq.s32.totalorder %s129, 0
    %s132 = sadd.s32 %s131, 1
    %s133 = scalar_select %p130, %s131, %s132
    %p136 = pneg %p130
    %p137 = scmp.eq.s32.totalorder %s11, 1
    %p138 = por %p136, %p137
    %p139 = scmp.ne.s32.totalorder %s131, %s134
    %p140 = scmp.eq.s32.totalorder %s11, 0
    %p141 = por %p139, %p140
    %p142 = scmp.ne.s32.totalorder %s131, %s134
    %p143 = scmp.eq.s32.totalorder %s16, 1
    %p144 = por %p142, %p143
    %p145 = scmp.ne.s32.totalorder %s134, %s135
    %p146 = scmp.eq.s32.totalorder %s16, 0
    %p147 = por %p145, %p146
    %p148 = scmp.ne.s32.totalorder %s134, %s135
    %p149 = scmp.eq.s32.totalorder %s17, 1
    %p150 = por %p148, %p149
    %p152 = scmp.ne.s32.totalorder %s135, %s151
    %p153 = scmp.eq.s32.totalorder %s17, 0
    %p154 = por %p152, %p153
    %p155 = scmp.le.s32.totalorder 1, %s11
    %p156 = scmp.lt.s32.totalorder %s11, 3
    %p157 = pnand %p155, %p156
    %p158 = pneg %p157
    // Predicated region
    $region9: #{global_filter_forward.1} parent=5 // pred_check
      _
    $region10: #{global_filter_forward.1} parent=5 // pred_check_branch
      %160 = sbr.rel (%p157) target = $region12
    $region11: #{global_filter_forward.1} parent=5 // pred_region
      %s161 = ssub.s32 %s11, 1
      // Predicated region
      $region13: #{global_filter_forward.1} parent=11 // pred_check
        %p162 = pneg %p58
      $region14: #{global_filter_forward.1} parent=11 // pred_check_branch
        %164 = sbr.rel (%p162) target = $region16
      $region15: #{global_filter_forward.1} parent=11 // pred_region
        _
      $region16: #{global_filter_forward.1} parent=11 // pred_fallthru
        _
      // Predicated region
      $region17: #{global_filter_forward.1} parent=11 // pred_check
        %p165 = pneg %p79
      $region18: #{global_filter_forward.1} parent=11 // pred_check_branch
        %167 = sbr.rel (%p165) target = $region20
      $region19: #{global_filter_forward.1} parent=11 // pred_region
        _
      $region20: #{global_filter_forward.1} parent=11 // pred_fallthru
        _
      // Predicated region
      $region21: #{global_filter_forward.1} parent=11 // pred_check
        %p168 = pneg %p100
      $region22: #{global_filter_forward.1} parent=11 // pred_check_branch
        %170 = sbr.rel (%p168) target = $region24
      $region23: #{global_filter_forward.1} parent=11 // pred_region
        _
      $region24: #{global_filter_forward.1} parent=11 // pred_fallthru
        _
      // Predicated region
      $region25: #{global_filter_forward.1} parent=11 // pred_check
        %p171 = pneg %p121
      $region26: #{global_filter_forward.1} parent=11 // pred_check_branch
        %173 = sbr.rel (%p171) target = $region28
      $region27: #{global_filter_forward.1} parent=11 // pred_region
        _
      $region28: #{global_filter_forward.1} parent=11 // pred_fallthru
        _
    $region12: #{global_filter_forward.1} parent=5 // pred_fallthru
      _
    %p174 = scmp.lt.s32.totalorder %s11, 2
    // Predicated region
    $region29: #{global_filter_forward.1} parent=5 // pred_check
      %p175 = pneg %p174
    $region30: #{global_filter_forward.1} parent=5 // pred_check_branch
      %177 = sbr.rel (%p175) target = $region32
    $region31: #{global_filter_forward.1} parent=5 // pred_region
      // Predicated region
      $region33: #{global_filter_forward.1} parent=31 // pred_check
        %p178 = pneg %p31
      $region34: #{global_filter_forward.1} parent=31 // pred_check_branch
        %180 = sbr.rel (%p178) target = $region36
      $region35: #{global_filter_forward.1} parent=31 // pred_region
        %s181 = smul.u32 4, %s11
        %p182 = scmp.lt.s32.totalorder %s181, 7
        %s183 = scalar_select %p182, %s181, 7
        %s184 = smul.addr %s183, 25
        %s185 = smul.addr %s184, 4
        %s186 = scalar_lea.vmem %s0, %s185
        %s187 = smul.u32 4, %s11
      $region36: #{global_filter_forward.1} parent=31 // pred_fallthru
        _
    $region32: #{global_filter_forward.1} parent=5 // pred_fallthru
      _
    %p188 = scmp.le.s32.totalorder 1, %s11
    %p189 = scmp.lt.s32.totalorder %s11, 3
    %p190 = pnand %p188, %p189
    %p191 = pneg %p190
    // Predicated region
    $region37: #{global_filter_forward.1} parent=5 // pred_check
      _
    $region38: #{global_filter_forward.1} parent=5 // pred_check_branch
      %193 = sbr.rel (%p190) target = $region40
    $region39: #{global_filter_forward.1} parent=5 // pred_region
      %s194 = ssub.s32 %s11, 1
      %s195 = smul.u32 4, %s16
      %p196 = scmp.lt.s32.totalorder %s195, 7
      %s197 = scalar_select %p196, %s195, 7
      %s198 = smul.addr %s197, 25
      %s199 = smul.addr %s198, 4
      %s200 = scalar_lea.vmem %s0, %s199
      %p201 = pneg %p37
      %p202 = pneg %p34
      %p203 = pneg %p58
      %p204 = pneg %p55
      %p205 = pneg %p79
      %p206 = pneg %p76
      %p207 = pneg %p100
      %p208 = pneg %p97
      %p209 = pneg %p121
      %p210 = pneg %p118
      %p211 = pneg %p147
      %p212 = pneg %p144
      %s213 = smul.u32 4, %s16
      %p214 = scmp.lt.s32.totalorder %s213, 7
      %s215 = scalar_select %p214, %s213, 7
      %s216 = smul.addr %s215, 25
      %s217 = smul.addr %s216, 8
      %s218 = scalar_lea.vmem %s5, %s217
      %s219 = smul.u32 4, %s16
      %p220 = scmp.lt.s32.totalorder %s219, 7
      %s221 = scalar_select %p220, %s219, 7
      %s222 = smul.addr %s221, 25
      %s223 = smul.addr %s222, 4
      %s224 = scalar_lea.vmem %s0, %s223
      %s225 = smul.u32 4, %s16
      %s226 = smul.u32 4, %s16
      %p227 = scmp.lt.s32.totalorder %s226, 7
      %s228 = scalar_select %p227, %s226, 7
      %s229 = smul.addr %s228, 25
      %s230 = smul.addr %s229, 8
      %s231 = scalar_lea.vmem %s5, %s230
      %s232 = smul.u32 4, %s16
      %v234 = vld [vmem:[%s1] sm:$0xff]
      %v235 = vld [vmem:[%s1 + $0x8] sm:$0xff]
      %v236 = vld [vmem:[%s1 + $0x10] sm:$0xff]
      %v237 = vld [vmem:[%s1 + $0x18] sm:$0xff]
      %v238 = vld [vmem:[%s1 + $0x20] sm:$0xff]
      %v239 = vld [vmem:[%s1 + $0x28] sm:$0xff]
      %v240 = vld [vmem:[%s1 + $0x30] sm:$0xff]
      %v241 = vld [vmem:[%s1 + $0x38] sm:$0xff]
      %v242 = vld [vmem:[%s1 + $0x40] sm:$0xff]
      %v243 = vld [vmem:[%s1 + $0x48] sm:$0xff]
      %v244 = vld [vmem:[%s1 + $0x50] sm:$0xff]
      %v245 = vld [vmem:[%s1 + $0x58] sm:$0xff]
      %v246 = vld [vmem:[%s1 + $0x60] sm:$0xff]
      %v247 = vld [vmem:[%s1 + $0x68] sm:$0xff]
      %v248 = vld [vmem:[%s1 + $0x70] sm:$0xff]
      %v249 = vld [vmem:[%s1 + $0x78] sm:$0xff]
      %v250 = vld [vmem:[%s1 + $0x80] sm:$0xff]
      %v251 = vld [vmem:[%s1 + $0x88] sm:$0xff]
      %v252 = vld [vmem:[%s1 + $0x90] sm:$0xff]
      %v253 = vld [vmem:[%s1 + $0x98] sm:$0xff]
      %v254 = vld [vmem:[%s1 + $0xa0] sm:$0xff]
      %v255 = vld [vmem:[%s1 + $0xa8] sm:$0xff]
      %v256 = vld [vmem:[%s1 + $0xb0] sm:$0xff]
      %v257 = vld [vmem:[%s1 + $0xb8] sm:$0xff]
      %v258 = vld [vmem:[%s1 + $0xc0] sm:$0xff]
      %v259 = vld [vmem:[%s1 + $0xc8] sm:$0xff]
      %v260 = vld [vmem:[%s1 + $0xd0] sm:$0xff]
      %v261 = vld [vmem:[%s1 + $0xd8] sm:$0xff]
      %v262 = vld [vmem:[%s1 + $0xe0] sm:$0xff]
      %v263 = vld [vmem:[%s1 + $0xe8] sm:$0xff]
      %v264 = vld [vmem:[%s1 + $0xf0] sm:$0xff]
      %v265 = vld [vmem:[%s1 + $0xf8] sm:$0xff]
      %v266 = vld [vmem:[%s2] sm:$0xff]
      %v267 = vld [vmem:[%s2 + $0x8] sm:$0xff]
      %v268 = vld [vmem:[%s2 + $0x10] sm:$0xff]
      %v269 = vld [vmem:[%s2 + $0x18] sm:$0xff]
      %v270 = vld [vmem:[%s2 + $0x20] sm:$0xff]
      %v271 = vld [vmem:[%s2 + $0x28] sm:$0xff]
      %v272 = vld [vmem:[%s2 + $0x30] sm:$0xff]
      %v273 = vld [vmem:[%s2 + $0x38] sm:$0xff]
      %v274 = vld [vmem:[%s2 + $0x40] sm:$0xff]
      %v275 = vld [vmem:[%s2 + $0x48] sm:$0xff]
      %v276 = vld [vmem:[%s2 + $0x50] sm:$0xff]
      %v277 = vld [vmem:[%s2 + $0x58] sm:$0xff]
      %v278 = vld [vmem:[%s2 + $0x60] sm:$0xff]
      %v279 = vld [vmem:[%s2 + $0x68] sm:$0xff]
      %v280 = vld [vmem:[%s2 + $0x70] sm:$0xff]
      %v281 = vld [vmem:[%s2 + $0x78] sm:$0xff]
      %v282 = vld [vmem:[%s2 + $0x80] sm:$0xff]
      %v283 = vld [vmem:[%s2 + $0x88] sm:$0xff]
      %v284 = vld [vmem:[%s2 + $0x90] sm:$0xff]
      %v285 = vld [vmem:[%s2 + $0x98] sm:$0xff]
      %v286 = vld [vmem:[%s2 + $0xa0] sm:$0xff]
      %v287 = vld [vmem:[%s2 + $0xa8] sm:$0xff]
      %v288 = vld [vmem:[%s2 + $0xb0] sm:$0xff]
      %v289 = vld [vmem:[%s2 + $0xb8] sm:$0xff]
      %v290 = vld [vmem:[%s2 + $0xc0] sm:$0x33]
      %v291 = vld [vmem:[%s3] sm:$0xff]
      %v292 = vld [vmem:[%s3 + $0x8] sm:$0xff]
      %v293 = vld [vmem:[%s3 + $0x10] sm:$0xff]
      %v294 = vld [vmem:[%s3 + $0x18] sm:$0xff]
      %v295 = vld [vmem:[%s3 + $0x20] sm:$0xff]
      %v296 = vld [vmem:[%s3 + $0x28] sm:$0xff]
      %v297 = vld [vmem:[%s3 + $0x30] sm:$0xff]
      %v298 = vld [vmem:[%s3 + $0x38] sm:$0xff]
      %v299 = vld [vmem:[%s3 + $0x40] sm:$0xff]
      %v300 = vld [vmem:[%s3 + $0x48] sm:$0xff]
      %v301 = vld [vmem:[%s3 + $0x50] sm:$0xff]
      %v302 = vld [vmem:[%s3 + $0x58] sm:$0xff]
      %v303 = vld [vmem:[%s3 + $0x60] sm:$0xff]
      %v304 = vld [vmem:[%s3 + $0x68] sm:$0xff]
      %v305 = vld [vmem:[%s3 + $0x70] sm:$0xff]
      %v306 = vld [vmem:[%s3 + $0x78] sm:$0xff]
      %v307 = vld [vmem:[%s3 + $0x80] sm:$0xff]
      %v308 = vld [vmem:[%s3 + $0x88] sm:$0xff]
      %v309 = vld [vmem:[%s3 + $0x90] sm:$0xff]
      %v310 = vld [vmem:[%s3 + $0x98] sm:$0xff]
      %v311 = vld [vmem:[%s3 + $0xa0] sm:$0xff]
      %v312 = vld [vmem:[%s3 + $0xa8] sm:$0xff]
      %v313 = vld [vmem:[%s3 + $0xb0] sm:$0xff]
      %v314 = vld [vmem:[%s3 + $0xb8] sm:$0xff]
      %v315 = vld [vmem:[%s3 + $0xc0] sm:$0xff]
      %v316 = vld [vmem:[%s3 + $0xc8] sm:$0xff]
      %v317 = vld [vmem:[%s3 + $0xd0] sm:$0xff]
      %v318 = vld [vmem:[%s3 + $0xd8] sm:$0xff]
      %v319 = vld [vmem:[%s3 + $0xe0] sm:$0xff]
      %v320 = vld [vmem:[%s3 + $0xe8] sm:$0xff]
      %v321 = vld [vmem:[%s3 + $0xf0] sm:$0xff]
      %v322 = vld [vmem:[%s3 + $0xf8] sm:$0xff]
      %v323 = vld [vmem:[%s4] sm:$0xff]
      %v324 = vld [vmem:[%s4 + $0x8] sm:$0xff]
      %v325 = vld [vmem:[%s4 + $0x10] sm:$0xff]
      %v326 = vld [vmem:[%s4 + $0x18] sm:$0xff]
      %v327 = vld [vmem:[%s4 + $0x20] sm:$0xff]
      %v328 = vld [vmem:[%s4 + $0x28] sm:$0xff]
      %v329 = vld [vmem:[%s4 + $0x30] sm:$0xff]
      %v330 = vld [vmem:[%s4 + $0x38] sm:$0xff]
      %v331 = vld [vmem:[%s4 + $0x40] sm:$0xff]
      %v332 = vld [vmem:[%s4 + $0x48] sm:$0xff]
      %v333 = vld [vmem:[%s4 + $0x50] sm:$0xff]
      %v334 = vld [vmem:[%s4 + $0x58] sm:$0xff]
      %v335 = vld [vmem:[%s4 + $0x60] sm:$0xff]
      %v336 = vld [vmem:[%s4 + $0x68] sm:$0xff]
      %v337 = vld [vmem:[%s4 + $0x70] sm:$0xff]
      %v338 = vld [vmem:[%s4 + $0x78] sm:$0xff]
      %v339 = vld [vmem:[%s4 + $0x80] sm:$0xff]
      %v340 = vld [vmem:[%s4 + $0x88] sm:$0xff]
      %v341 = vld [vmem:[%s4 + $0x90] sm:$0xff]
      %v342 = vld [vmem:[%s4 + $0x98] sm:$0xff]
      %v343 = vld [vmem:[%s4 + $0xa0] sm:$0xff]
      %v344 = vld [vmem:[%s4 + $0xa8] sm:$0xff]
      %v345 = vld [vmem:[%s4 + $0xb0] sm:$0xff]
      %v346 = vld [vmem:[%s4 + $0xb8] sm:$0xff]
      %v347 = vld [vmem:[%s4 + $0xc0] sm:$0xff]
      %v348 = vld [vmem:[%s4 + $0xc8] sm:$0xff]
      %v349 = vld [vmem:[%s4 + $0xd0] sm:$0xff]
      %v350 = vld [vmem:[%s4 + $0xd8] sm:$0xff]
      %v351 = vld [vmem:[%s4 + $0xe0] sm:$0xff]
      %v352 = vld [vmem:[%s4 + $0xe8] sm:$0xff]
      %v353 = vld [vmem:[%s4 + $0xf0] sm:$0xff]
      %v354 = vld [vmem:[%s4 + $0xf8] sm:$0xff]
      %v355 = vld [vmem:[%s224] sm:$0xf]
      %v356 = vld [vmem:[%s224 + $0x4] sm:$0xf]
      %v357 = vld [vmem:[%s224 + $0x8] sm:$0xf]
      %v358 = vld [vmem:[%s224 + $0xc] sm:$0xf]
      %v359 = vld [vmem:[%s224 + $0x10] sm:$0xf]
      %v360 = vld [vmem:[%s224 + $0x14] sm:$0xf]
      %v361 = vld [vmem:[%s224 + $0x18] sm:$0xf]
      %v362 = vld [vmem:[%s224 + $0x1c] sm:$0xf]
      %v363 = vld [vmem:[%s224 + $0x20] sm:$0xf]
      %v364 = vld [vmem:[%s224 + $0x24] sm:$0xf]
      %v365 = vld [vmem:[%s224 + $0x28] sm:$0xf]
      %v366 = vld [vmem:[%s224 + $0x2c] sm:$0xf]
      %v367 = vld [vmem:[%s224 + $0x30] sm:$0xf]
      %v368 = vld [vmem:[%s224 + $0x34] sm:$0xf]
      %v369 = vld [vmem:[%s224 + $0x38] sm:$0xf]
      %v370 = vld [vmem:[%s224 + $0x3c] sm:$0xf]
      %v371 = vld [vmem:[%s224 + $0x40] sm:$0xf]
      %v372 = vld [vmem:[%s224 + $0x44] sm:$0xf]
      %v373 = vld [vmem:[%s224 + $0x48] sm:$0xf]
      %v374 = vld [vmem:[%s224 + $0x4c] sm:$0xf]
      %v375 = vld [vmem:[%s224 + $0x50] sm:$0xf]
      %v376 = vld [vmem:[%s224 + $0x54] sm:$0xf]
      %v377 = vld [vmem:[%s224 + $0x58] sm:$0xf]
      %v378 = vld [vmem:[%s224 + $0x5c] sm:$0xf]
      %v379 = vld [vmem:[%s224 + $0x60] sm:$0x3]
      %v412 = vunpack.c.l.b16 %v234
      %v413 = vunpack.c.h.b16 %v234
      %v414 = vunpack.c.l.b16 %v235
      %v415 = vunpack.c.h.b16 %v235
      %v416 = vunpack.c.l.b16 %v236
      %v417 = vunpack.c.h.b16 %v236
      %v418 = vunpack.c.l.b16 %v237
      %v419 = vunpack.c.h.b16 %v237
      %v420 = vunpack.c.l.b16 %v238
      %v421 = vunpack.c.h.b16 %v238
      %v422 = vunpack.c.l.b16 %v239
      %v423 = vunpack.c.h.b16 %v239
      %v424 = vunpack.c.l.b16 %v240
      %v425 = vunpack.c.h.b16 %v240
      %v426 = vunpack.c.l.b16 %v241
      %v427 = vunpack.c.h.b16 %v241
      %v428 = vunpack.c.l.b16 %v242
      %v429 = vunpack.c.h.b16 %v242
      %v430 = vunpack.c.l.b16 %v243
      %v431 = vunpack.c.h.b16 %v243
      %v432 = vunpack.c.l.b16 %v244
      %v433 = vunpack.c.h.b16 %v244
      %v434 = vunpack.c.l.b16 %v245
      %v435 = vunpack.c.h.b16 %v245
      %v436 = vunpack.c.l.b16 %v246
      %v437 = vunpack.c.h.b16 %v246
      %v438 = vunpack.c.l.b16 %v247
      %v439 = vunpack.c.h.b16 %v247
      %v440 = vunpack.c.l.b16 %v248
      %v441 = vunpack.c.h.b16 %v248
      %v442 = vunpack.c.l.b16 %v249
      %v443 = vunpack.c.h.b16 %v249
      %v444 = vunpack.c.l.b16 %v250
      %v445 = vunpack.c.h.b16 %v250
      %v446 = vunpack.c.l.b16 %v251
      %v447 = vunpack.c.h.b16 %v251
      %v448 = vunpack.c.l.b16 %v252
      %v449 = vunpack.c.h.b16 %v252
      %v450 = vunpack.c.l.b16 %v253
      %v451 = vunpack.c.h.b16 %v253
      %v452 = vunpack.c.l.b16 %v254
      %v453 = vunpack.c.h.b16 %v254
      %v454 = vunpack.c.l.b16 %v255
      %v455 = vunpack.c.h.b16 %v255
      %v456 = vunpack.c.l.b16 %v256
      %v457 = vunpack.c.h.b16 %v256
      %v458 = vunpack.c.l.b16 %v257
      %v459 = vunpack.c.h.b16 %v257
      %v460 = vunpack.c.l.b16 %v258
      %v461 = vunpack.c.h.b16 %v258
      %v462 = vunpack.c.l.b16 %v259
      %v463 = vunpack.c.h.b16 %v259
      %v464 = vunpack.c.l.b16 %v260
      %v465 = vunpack.c.h.b16 %v260
      %v466 = vunpack.c.l.b16 %v261
      %v467 = vunpack.c.h.b16 %v261
      %v468 = vunpack.c.l.b16 %v262
      %v469 = vunpack.c.h.b16 %v262
      %v470 = vunpack.c.l.b16 %v263
      %v471 = vunpack.c.h.b16 %v263
      %v472 = vunpack.c.l.b16 %v264
      %v473 = vunpack.c.h.b16 %v264
      %v474 = vunpack.c.l.b16 %v265
      %v475 = vunpack.c.h.b16 %v265
      %v476 = vpack.c.b16 %v414, %v412
      %v477 = vpack.c.b16 %v415, %v413
      %v478 = vpack.c.b16 %v418, %v416
      %v479 = vpack.c.b16 %v419, %v417
      %v480 = vpack.c.b16 %v422, %v420
      %v481 = vpack.c.b16 %v423, %v421
      %v482 = vpack.c.b16 %v426, %v424
      %v483 = vpack.c.b16 %v427, %v425
      %v484 = vpack.c.b16 %v430, %v428
      %v485 = vpack.c.b16 %v431, %v429
      %v486 = vpack.c.b16 %v434, %v432
      %v487 = vpack.c.b16 %v435, %v433
      %v488 = vpack.c.b16 %v438, %v436
      %v489 = vpack.c.b16 %v439, %v437
      %v490 = vpack.c.b16 %v442, %v440
      %v491 = vpack.c.b16 %v443, %v441
      %v492 = vpack.c.b16 %v446, %v444
      %v493 = vpack.c.b16 %v447, %v445
      %v494 = vpack.c.b16 %v450, %v448
      %v495 = vpack.c.b16 %v451, %v449
      %v496 = vpack.c.b16 %v454, %v452
      %v497 = vpack.c.b16 %v455, %v453
      %v498 = vpack.c.b16 %v458, %v456
      %v499 = vpack.c.b16 %v459, %v457
      %v500 = vpack.c.b16 %v462, %v460
      %v501 = vpack.c.b16 %v463, %v461
      %v502 = vpack.c.b16 %v466, %v464
      %v503 = vpack.c.b16 %v467, %v465
      %v504 = vpack.c.b16 %v470, %v468
      %v505 = vpack.c.b16 %v471, %v469
      %v506 = vpack.c.b16 %v474, %v472
      %v507 = vpack.c.b16 %v475, %v473
      %v549 = vunpack.c.l.b16 %v355
      %v550 = vunpack.c.l.b16 %v356
      %v551 = vunpack.c.l.b16 %v357
      %v552 = vunpack.c.l.b16 %v358
      %v553 = vunpack.c.l.b16 %v359
      %v554 = vunpack.c.l.b16 %v360
      %v555 = vunpack.c.l.b16 %v361
      %v556 = vunpack.c.l.b16 %v362
      %v557 = vunpack.c.l.b16 %v363
      %v558 = vunpack.c.l.b16 %v364
      %v559 = vunpack.c.l.b16 %v365
      %v560 = vunpack.c.l.b16 %v366
      %v561 = vunpack.c.l.b16 %v367
      %v562 = vunpack.c.l.b16 %v368
      %v563 = vunpack.c.l.b16 %v369
      %v564 = vunpack.c.l.b16 %v370
      %v565 = vunpack.c.l.b16 %v371
      %v566 = vunpack.c.l.b16 %v372
      %v567 = vunpack.c.l.b16 %v373
      %v568 = vunpack.c.l.b16 %v374
      %v569 = vunpack.c.l.b16 %v375
      %v570 = vunpack.c.l.b16 %v376
      %v571 = vunpack.c.l.b16 %v377
      %v572 = vunpack.c.l.b16 %v378
      %v573 = vunpack.c.l.b16 %v379
      %v574 = vpack.c.b16 %v550, %v549
      %v575 = vpack.c.b16 %v552, %v551
      %v576 = vpack.c.b16 %v554, %v553
      %v577 = vpack.c.b16 %v556, %v555
      %v578 = vpack.c.b16 %v558, %v557
      %v579 = vpack.c.b16 %v560, %v559
      %v580 = vpack.c.b16 %v562, %v561
      %v581 = vpack.c.b16 %v564, %v563
      %v582 = vpack.c.b16 %v566, %v565
      %v583 = vpack.c.b16 %v568, %v567
      %v584 = vpack.c.b16 %v570, %v569
      %v585 = vpack.c.b16 %v572, %v571
      %v586 = vpack.c.b16 %v573, %v573
      %vm599 = vcmask 556032
      %v601 = vsel %vm599, %v477, 0
      %v604 = vsel %vm599, %v479, 0
      %v607 = vsel %vm599, %v481, 0
      %v610 = vsel %vm599, %v483, 0
      %v613 = vsel %vm599, %v485, 0
      %v616 = vsel %vm599, %v487, 0
      %v619 = vsel %vm599, %v489, 0
      %v622 = vsel %vm599, %v491, 0
      %v625 = vsel %vm599, %v493, 0
      %v628 = vsel %vm599, %v495, 0
      %v631 = vsel %vm599, %v497, 0
      %v634 = vsel %vm599, %v499, 0
      %v637 = vsel %vm599, %v501, 0
      %v640 = vsel %vm599, %v503, 0
      %v643 = vsel %vm599, %v505, 0
      %v646 = vsel %vm599, %v507, 0
      %vm648 = vcmask 1041408
      %v650 = vsel %vm648, %v586, 0
      %652 = vmatprep.subr.bf16.mxu0 0
      %653 = vmatpush1.bf16.msra.mxu0 %v574
      %654 = vmatprep.subr.bf16.mxu0 0
      %655 = vmatpush1.bf16.msra.mxu0 %v575
      %656 = vmatprep.subr.bf16.mxu0 0
      %657 = vmatpush1.bf16.msra.mxu0 %v576
      %658 = vmatprep.subr.bf16.mxu0 0
      %659 = vmatpush1.bf16.msra.mxu0 %v577
      %660 = vmatprep.subr.bf16.mxu0 0
      %661 = vmatpush1.bf16.msra.mxu0 %v578
      %662 = vmatprep.subr.bf16.mxu0 0
      %663 = vmatpush1.bf16.msra.mxu0 %v579
      %664 = vmatprep.subr.bf16.mxu0 0
      %665 = vmatpush1.bf16.msra.mxu0 %v580
      %666 = vmatprep.subr.bf16.mxu0 0
      %667 = vmatpush1.bf16.msra.mxu0 %v581
      %668 = vmatprep.subr.bf16.mxu0 0
      %669 = vmatpush1.bf16.msra.mxu0 %v582
      %670 = vmatprep.subr.bf16.mxu0 0
      %671 = vmatpush1.bf16.msra.mxu0 %v583
      %672 = vmatprep.subr.bf16.mxu0 0
      %673 = vmatpush1.bf16.msra.mxu0 %v584
      %674 = vmatprep.subr.bf16.mxu0 0
      %675 = vmatpush1.bf16.msra.mxu0 %v585
      %676 = vmatprep.subr.bf16.mxu0 0
      %677 = vmatpush1.bf16.msra.mxu0 %v650
      %678 = vmatprep.subr.bf16.mxu0 0
      %679 = vmatpush1.bf16.msra.mxu0 0
      %680 = vmatprep.subr.bf16.mxu0 0
      %681 = vmatpush1.bf16.msra.mxu0 0
      %682 = vmatprep.subr.bf16.mxu0 0
      %683 = vmatpush1.bf16.msra.mxu0 0
      %684 = vmatprep.mubr.bf16.mxu0 %v601
      %685 = vmatmul.mubr.bf16.gmra.mrb[0].mxu0 %v476
      %v686 = vpop.f32.mrb[0].mxu0
      %v687 = vadd.f32 0.0, %v686
      %v688 = vpop.f32.mrb[0].mxu0
      %v689 = vpop.f32.mrb[0].mxu0
      %v690 = vadd.f32 0.0, %v689
      %v691 = vpop.f32.mrb[0].mxu0
      %692 = vmatprep.mubr.bf16.mxu0 %v604
      %693 = vmatmul.mubr.bf16.gmra.mrb[0].mxu0 %v478
      %v694 = vpop.f32.mrb[0].mxu0
      %v695 = vadd.f32 0.0, %v694
      %v696 = vpop.f32.mrb[0].mxu0
      %v697 = vpop.f32.mrb[0].mxu0
      %v698 = vadd.f32 0.0, %v697
      %v699 = vpop.f32.mrb[0].mxu0
      %700 = vmatprep.mubr.bf16.mxu0 %v607
      %701 = vmatmul.mubr.bf16.gmra.mrb[0].mxu0 %v480
      %v702 = vpop.f32.mrb[0].mxu0
      %v703 = vadd.f32 0.0, %v702
      %v704 = vpop.f32.mrb[0].mxu0
      %v705 = vpop.f32.mrb[0].mxu0
      %v706 = vadd.f32 0.0, %v705
      %v707 = vpop.f32.mrb[0].mxu0
      %708 = vmatprep.mubr.bf16.mxu0 %v610
      %709 = vmatmul.mubr.bf16.gmra.mrb[0].mxu0 %v482
      %v710 = vpop.f32.mrb[0].mxu0
      %v711 = vadd.f32 0.0, %v710
      %v712 = vpop.f32.mrb[0].mxu0
      %v713 = vpop.f32.mrb[0].mxu0
      %v714 = vadd.f32 0.0, %v713
      %v715 = vpop.f32.mrb[0].mxu0
      %716 = vmatprep.mubr.bf16.mxu0 %v613
      %717 = vmatmul.mubr.bf16.gmra.mrb[0].mxu0 %v484
      %v718 = vpop.f32.mrb[0].mxu0
      %v719 = vadd.f32 0.0, %v718
      %v720 = vpop.f32.mrb[0].mxu0
      %v721 = vpop.f32.mrb[0].mxu0
      %v722 = vadd.f32 0.0, %v721
      %v723 = vpop.f32.mrb[0].mxu0
      %724 = vmatprep.mubr.bf16.mxu0 %v616
      %725 = vmatmul.mubr.bf16.gmra.mrb[0].mxu0 %v486
      %v726 = vpop.f32.mrb[0].mxu0
      %v727 = vadd.f32 0.0, %v726
      %v728 = vpop.f32.mrb[0].mxu0
      %v729 = vpop.f32.mrb[0].mxu0
      %v730 = vadd.f32 0.0, %v729
      %v731 = vpop.f32.mrb[0].mxu0
      %732 = vmatprep.mubr.bf16.mxu0 %v619
      %733 = vmatmul.mubr.bf16.gmra.mrb[0].mxu0 %v488
      %v734 = vpop.f32.mrb[0].mxu0
      %v735 = vadd.f32 0.0, %v734
      %v736 = vpop.f32.mrb[0].mxu0
      %v737 = vpop.f32.mrb[0].mxu0
      %v738 = vadd.f32 0.0, %v737
      %v739 = vpop.f32.mrb[0].mxu0
      %740 = vmatprep.mubr.bf16.mxu0 %v622
      %741 = vmatmul.mubr.bf16.gmra.mrb[0].mxu0 %v490
      %v742 = vpop.f32.mrb[0].mxu0
      %v743 = vadd.f32 0.0, %v742
      %v744 = vpop.f32.mrb[0].mxu0
      %v745 = vpop.f32.mrb[0].mxu0
      %v746 = vadd.f32 0.0, %v745
      %v747 = vpop.f32.mrb[0].mxu0
      %748 = vmatprep.mubr.bf16.mxu0 %v625
      %749 = vmatmul.mubr.bf16.gmra.mrb[0].mxu0 %v492
      %v750 = vpop.f32.mrb[0].mxu0
      %v751 = vadd.f32 0.0, %v750
      %v752 = vpop.f32.mrb[0].mxu0
      %v753 = vpop.f32.mrb[0].mxu0
      %v754 = vadd.f32 0.0, %v753
      %v755 = vpop.f32.mrb[0].mxu0
      %756 = vmatprep.mubr.bf16.mxu0 %v628
      %757 = vmatmul.mubr.bf16.gmra.mrb[0].mxu0 %v494
      %v758 = vpop.f32.mrb[0].mxu0
      %v759 = vadd.f32 0.0, %v758
      %v760 = vpop.f32.mrb[0].mxu0
      %v761 = vpop.f32.mrb[0].mxu0
      %v762 = vadd.f32 0.0, %v761
      %v763 = vpop.f32.mrb[0].mxu0
      %764 = vmatprep.mubr.bf16.mxu0 %v631
      %765 = vmatmul.mubr.bf16.gmra.mrb[0].mxu0 %v496
      %v766 = vpop.f32.mrb[0].mxu0
      %v767 = vadd.f32 0.0, %v766
      %v768 = vpop.f32.mrb[0].mxu0
      %v769 = vpop.f32.mrb[0].mxu0
      %v770 = vadd.f32 0.0, %v769
      %v771 = vpop.f32.mrb[0].mxu0
      %772 = vmatprep.mubr.bf16.mxu0 %v634
      %773 = vmatmul.mubr.bf16.gmra.mrb[0].mxu0 %v498
      %v774 = vpop.f32.mrb[0].mxu0
      %v775 = vadd.f32 0.0, %v774
      %v776 = vpop.f32.mrb[0].mxu0
      %v777 = vpop.f32.mrb[0].mxu0
      %v778 = vadd.f32 0.0, %v777
      %v779 = vpop.f32.mrb[0].mxu0
      %780 = vmatprep.mubr.bf16.mxu0 %v637
      %781 = vmatmul.mubr.bf16.gmra.mrb[0].mxu0 %v500
      %v782 = vpop.f32.mrb[0].mxu0
      %v783 = vadd.f32 0.0, %v782
      %v784 = vpop.f32.mrb[0].mxu0
      %v785 = vpop.f32.mrb[0].mxu0
      %v786 = vadd.f32 0.0, %v785
      %v787 = vpop.f32.mrb[0].mxu0
      %788 = vmatprep.mubr.bf16.mxu0 %v640
      %789 = vmatmul.mubr.bf16.gmra.mrb[0].mxu0 %v502
      %v790 = vpop.f32.mrb[0].mxu0
      %v791 = vadd.f32 0.0, %v790
      %v792 = vpop.f32.mrb[0].mxu0
      %v793 = vpop.f32.mrb[0].mxu0
      %v794 = vadd.f32 0.0, %v793
      %v795 = vpop.f32.mrb[0].mxu0
      %796 = vmatprep.mubr.bf16.mxu0 %v643
      %797 = vmatmul.mubr.bf16.gmra.mrb[0].mxu0 %v504
      %v798 = vpop.f32.mrb[0].mxu0
      %v799 = vadd.f32 0.0, %v798
      %v800 = vpop.f32.mrb[0].mxu0
      %v801 = vpop.f32.mrb[0].mxu0
      %v802 = vadd.f32 0.0, %v801
      %v803 = vpop.f32.mrb[0].mxu0
      %804 = vmatprep.mubr.bf16.mxu0 %v646
      %805 = vmatmul.mubr.bf16.gmra.mrb[0].mxu0 %v506
      %v806 = vpop.f32.mrb[0].mxu0
      %v807 = vadd.f32 0.0, %v806
      %v808 = vpop.f32.mrb[0].mxu0
      %v809 = vpop.f32.mrb[0].mxu0
      %v810 = vadd.f32 0.0, %v809
      %v811 = vpop.f32.mrb[0].mxu0
      %812 = vdwg.mxu0
      %v813 = vmul.f32 %v687, %v291
      %v814 = vmul.f32 %v690, %v292
      %v815 = vmul.f32 %v695, %v293
      %v816 = vmul.f32 %v698, %v294
      %v817 = vmul.f32 %v703, %v295
      %v818 = vmul.f32 %v706, %v296
      %v819 = vmul.f32 %v711, %v297
      %v820 = vmul.f32 %v714, %v298
      %v821 = vmul.f32 %v719, %v299
      %v822 = vmul.f32 %v722, %v300
      %v823 = vmul.f32 %v727, %v301
      %v824 = vmul.f32 %v730, %v302
      %v825 = vmul.f32 %v735, %v303
      %v826 = vmul.f32 %v738, %v304
      %v827 = vmul.f32 %v743, %v305
      %v828 = vmul.f32 %v746, %v306
      %v829 = vmul.f32 %v751, %v307
      %v830 = vmul.f32 %v754, %v308
      %v831 = vmul.f32 %v759, %v309
      %v832 = vmul.f32 %v762, %v310
      %v833 = vmul.f32 %v767, %v311
      %v834 = vmul.f32 %v770, %v312
      %v835 = vmul.f32 %v775, %v313
      %v836 = vmul.f32 %v778, %v314
      %v837 = vmul.f32 %v783, %v315
      %v838 = vmul.f32 %v786, %v316
      %v839 = vmul.f32 %v791, %v317
      %v840 = vmul.f32 %v794, %v318
      %v841 = vmul.f32 %v799, %v319
      %v842 = vmul.f32 %v802, %v320
      %v843 = vmul.f32 %v807, %v321
      %v844 = vmul.f32 %v810, %v322
      %v845 = vmul.f32 %v751, %v323
      %v846 = vmul.f32 %v754, %v324
      %v847 = vmul.f32 %v759, %v325
      %v848 = vmul.f32 %v762, %v326
      %v849 = vmul.f32 %v767, %v327
      %v850 = vmul.f32 %v770, %v328
      %v851 = vmul.f32 %v775, %v329
      %v852 = vmul.f32 %v778, %v330
      %v853 = vmul.f32 %v783, %v331
      %v854 = vmul.f32 %v786, %v332
      %v855 = vmul.f32 %v791, %v333
      %v856 = vmul.f32 %v794, %v334
      %v857 = vmul.f32 %v799, %v335
      %v858 = vmul.f32 %v802, %v336
      %v859 = vmul.f32 %v807, %v337
      %v860 = vmul.f32 %v810, %v338
      %v861 = vmul.f32 %v687, %v339
      %v862 = vmul.f32 %v690, %v340
      %v863 = vmul.f32 %v695, %v341
      %v864 = vmul.f32 %v698, %v342
      %v865 = vmul.f32 %v703, %v343
      %v866 = vmul.f32 %v706, %v344
      %v867 = vmul.f32 %v711, %v345
      %v868 = vmul.f32 %v714, %v346
      %v869 = vmul.f32 %v719, %v347
      %v870 = vmul.f32 %v722, %v348
      %v871 = vmul.f32 %v727, %v349
      %v872 = vmul.f32 %v730, %v350
      %v873 = vmul.f32 %v735, %v351
      %v874 = vmul.f32 %v738, %v352
      %v875 = vmul.f32 %v743, %v353
      %v876 = vmul.f32 %v746, %v354
      %v877 = vadd.f32 %v813, %v845
      %v878 = vadd.f32 %v814, %v846
      %v879 = vadd.f32 %v815, %v847
      %v880 = vadd.f32 %v816, %v848
      %v881 = vadd.f32 %v817, %v849
      %v882 = vadd.f32 %v818, %v850
      %v883 = vadd.f32 %v819, %v851
      %v884 = vadd.f32 %v820, %v852
      %v885 = vadd.f32 %v821, %v853
      %v886 = vadd.f32 %v822, %v854
      %v887 = vadd.f32 %v823, %v855
      %v888 = vadd.f32 %v824, %v856
      %v889 = vadd.f32 %v825, %v857
      %v890 = vadd.f32 %v826, %v858
      %v891 = vadd.f32 %v827, %v859
      %v892 = vadd.f32 %v828, %v860
      %v893 = vadd.f32 %v829, %v861
      %v894 = vadd.f32 %v830, %v862
      %v895 = vadd.f32 %v831, %v863
      %v896 = vadd.f32 %v832, %v864
      %v897 = vadd.f32 %v833, %v865
      %v898 = vadd.f32 %v834, %v866
      %v899 = vadd.f32 %v835, %v867
      %v900 = vadd.f32 %v836, %v868
      %v901 = vadd.f32 %v837, %v869
      %v902 = vadd.f32 %v838, %v870
      %v903 = vadd.f32 %v839, %v871
      %v904 = vadd.f32 %v840, %v872
      %v905 = vadd.f32 %v841, %v873
      %v906 = vadd.f32 %v842, %v874
      %v907 = vadd.f32 %v843, %v875
      %v908 = vadd.f32 %v844, %v876
      %v909 = vpack.c.bf16 %v878, %v877
      %v910 = vpack.c.bf16 %v880, %v879
      %v911 = vpack.c.bf16 %v882, %v881
      %v912 = vpack.c.bf16 %v884, %v883
      %v913 = vpack.c.bf16 %v886, %v885
      %v914 = vpack.c.bf16 %v888, %v887
      %v915 = vpack.c.bf16 %v890, %v889
      %v916 = vpack.c.bf16 %v892, %v891
      %v917 = vpack.c.bf16 %v894, %v893
      %v918 = vpack.c.bf16 %v896, %v895
      %v919 = vpack.c.bf16 %v898, %v897
      %v920 = vpack.c.bf16 %v900, %v899
      %v921 = vpack.c.bf16 %v902, %v901
      %v922 = vpack.c.bf16 %v904, %v903
      %v923 = vpack.c.bf16 %v906, %v905
      %v924 = vpack.c.bf16 %v908, %v907
      %v950 = vunpack.c.l.b16 %v266
      %v951 = vunpack.c.h.b16 %v266
      %v952 = vunpack.c.l.b16 %v267
      %v953 = vunpack.c.h.b16 %v267
      %v954 = vunpack.c.l.b16 %v268
      %v955 = vunpack.c.h.b16 %v268
      %v956 = vunpack.c.l.b16 %v269
      %v957 = vunpack.c.h.b16 %v269
      %v958 = vunpack.c.l.b16 %v270
      %v959 = vunpack.c.h.b16 %v270
      %v960 = vunpack.c.l.b16 %v271
      %v961 = vunpack.c.h.b16 %v271
      %v962 = vunpack.c.l.b16 %v272
      %v963 = vunpack.c.h.b16 %v272
      %v964 = vunpack.c.l.b16 %v273
      %v965 = vunpack.c.h.b16 %v273
      %v966 = vunpack.c.l.b16 %v274
      %v967 = vunpack.c.h.b16 %v274
      %v968 = vunpack.c.l.b16 %v275
      %v969 = vunpack.c.h.b16 %v275
      %v970 = vunpack.c.l.b16 %v276
      %v971 = vunpack.c.h.b16 %v276
      %v972 = vunpack.c.l.b16 %v277
      %v973 = vunpack.c.h.b16 %v277
      %v974 = vunpack.c.l.b16 %v278
      %v975 = vunpack.c.h.b16 %v278
      %v976 = vunpack.c.l.b16 %v279
      %v977 = vunpack.c.h.b16 %v279
      %v978 = vunpack.c.l.b16 %v280
      %v979 = vunpack.c.h.b16 %v280
      %v980 = vunpack.c.l.b16 %v281
      %v981 = vunpack.c.h.b16 %v281
      %v982 = vunpack.c.l.b16 %v282
      %v983 = vunpack.c.h.b16 %v282
      %v984 = vunpack.c.l.b16 %v283
      %v985 = vunpack.c.h.b16 %v283
      %v986 = vunpack.c.l.b16 %v284
      %v987 = vunpack.c.h.b16 %v284
      %v988 = vunpack.c.l.b16 %v285
      %v989 = vunpack.c.h.b16 %v285
      %v990 = vunpack.c.l.b16 %v286
      %v991 = vunpack.c.h.b16 %v286
      %v992 = vunpack.c.l.b16 %v287
      %v993 = vunpack.c.h.b16 %v287
      %v994 = vunpack.c.l.b16 %v288
      %v995 = vunpack.c.h.b16 %v288
      %v996 = vunpack.c.l.b16 %v289
      %v997 = vunpack.c.h.b16 %v289
      %v998 = vunpack.c.l.b16 %v290
      %v999 = vunpack.c.h.b16 %v290
      %v1000 = vpack.c.b16 %v952, %v950
      %v1001 = vpack.c.b16 %v953, %v951
      %v1002 = vpack.c.b16 %v956, %v954
      %v1003 = vpack.c.b16 %v957, %v955
      %v1004 = vpack.c.b16 %v960, %v958
      %v1005 = vpack.c.b16 %v961, %v959
      %v1006 = vpack.c.b16 %v964, %v962
      %v1007 = vpack.c.b16 %v965, %v963
      %v1008 = vpack.c.b16 %v968, %v966
      %v1009 = vpack.c.b16 %v969, %v967
      %v1010 = vpack.c.b16 %v972, %v970
      %v1011 = vpack.c.b16 %v973, %v971
      %v1012 = vpack.c.b16 %v976, %v974
      %v1013 = vpack.c.b16 %v977, %v975
      %v1014 = vpack.c.b16 %v980, %v978
      %v1015 = vpack.c.b16 %v981, %v979
      %v1016 = vpack.c.b16 %v984, %v982
      %v1017 = vpack.c.b16 %v985, %v983
      %v1018 = vpack.c.b16 %v988, %v986
      %v1019 = vpack.c.b16 %v989, %v987
      %v1020 = vpack.c.b16 %v992, %v990
      %v1021 = vpack.c.b16 %v993, %v991
      %v1022 = vpack.c.b16 %v996, %v994
      %v1023 = vpack.c.b16 %v997, %v995
      %v1024 = vpack.c.b16 %v998, %v998
      %v1025 = vpack.c.b16 %v999, %v999
      %1052 = vmatprep.subr.bf16.mxu0 0
      %1053 = vmatpush1.bf16.msra.mxu0 %v909
      %1054 = vmatprep.subr.bf16.mxu0 0
      %1055 = vmatpush1.bf16.msra.mxu0 %v910
      %1056 = vmatprep.subr.bf16.mxu0 0
      %1057 = vmatpush1.bf16.msra.mxu0 %v911
      %1058 = vmatprep.subr.bf16.mxu0 0
      %1059 = vmatpush1.bf16.msra.mxu0 %v912
      %1060 = vmatprep.subr.bf16.mxu0 0
      %1061 = vmatpush1.bf16.msra.mxu0 %v913
      %1062 = vmatprep.subr.bf16.mxu0 0
      %1063 = vmatpush1.bf16.msra.mxu0 %v914
      %1064 = vmatprep.subr.bf16.mxu0 0
      %1065 = vmatpush1.bf16.msra.mxu0 %v915
      %1066 = vmatprep.subr.bf16.mxu0 0
      %1067 = vmatpush1.bf16.msra.mxu0 %v916
      %1068 = vmatprep.subr.bf16.mxu0 0
      %1069 = vmatpush1.bf16.msra.mxu0 %v917
      %1070 = vmatprep.subr.bf16.mxu0 0
      %1071 = vmatpush1.bf16.msra.mxu0 %v918
      %1072 = vmatprep.subr.bf16.mxu0 0
      %1073 = vmatpush1.bf16.msra.mxu0 %v919
      %1074 = vmatprep.subr.bf16.mxu0 0
      %1075 = vmatpush1.bf16.msra.mxu0 %v920
      %1076 = vmatprep.subr.bf16.mxu0 0
      %1077 = vmatpush1.bf16.msra.mxu0 %v921
      %1078 = vmatprep.subr.bf16.mxu0 0
      %1079 = vmatpush1.bf16.msra.mxu0 %v922
      %1080 = vmatprep.subr.bf16.mxu0 0
      %1081 = vmatpush1.bf16.msra.mxu0 %v923
      %1082 = vmatprep.subr.bf16.mxu0 0
      %1083 = vmatpush1.bf16.msra.mxu0 %v924
      %1084 = vmatprep.mubr.bf16.mxu0 %v1001
      %1085 = vmatmul.mubr.bf16.gmra.mrb[0].mxu0 %v1000
      %v1086 = vpop.f32.mrb[0].mxu0
      %v1087 = vadd.f32 0.0, %v1086
      %v1088 = vpop.f32.mrb[0].mxu0
      %v1089 = vpop.f32.mrb[0].mxu0
      %v1090 = vadd.f32 0.0, %v1089
      %v1091 = vpop.f32.mrb[0].mxu0
      %1092 = vmatprep.mubr.bf16.mxu0 %v1003
      %1093 = vmatmul.mubr.bf16.gmra.mrb[0].mxu0 %v1002
      %v1094 = vpop.f32.mrb[0].mxu0
      %v1095 = vadd.f32 0.0, %v1094
      %v1096 = vpop.f32.mrb[0].mxu0
      %v1097 = vpop.f32.mrb[0].mxu0
      %v1098 = vadd.f32 0.0, %v1097
      %v1099 = vpop.f32.mrb[0].mxu0
      %1100 = vmatprep.mubr.bf16.mxu0 %v1005
      %1101 = vmatmul.mubr.bf16.gmra.mrb[0].mxu0 %v1004
      %v1102 = vpop.f32.mrb[0].mxu0
      %v1103 = vadd.f32 0.0, %v1102
      %v1104 = vpop.f32.mrb[0].mxu0
      %v1105 = vpop.f32.mrb[0].mxu0
      %v1106 = vadd.f32 0.0, %v1105
      %v1107 = vpop.f32.mrb[0].mxu0
      %1108 = vmatprep.mubr.bf16.mxu0 %v1007
      %1109 = vmatmul.mubr.bf16.gmra.mrb[0].mxu0 %v1006
      %v1110 = vpop.f32.mrb[0].mxu0
      %v1111 = vadd.f32 0.0, %v1110
      %v1112 = vpop.f32.mrb[0].mxu0
      %v1113 = vpop.f32.mrb[0].mxu0
      %v1114 = vadd.f32 0.0, %v1113
      %v1115 = vpop.f32.mrb[0].mxu0
      %1116 = vmatprep.mubr.bf16.mxu0 %v1009
      %1117 = vmatmul.mubr.bf16.gmra.mrb[0].mxu0 %v1008
      %v1118 = vpop.f32.mrb[0].mxu0
      %v1119 = vadd.f32 0.0, %v1118
      %v1120 = vpop.f32.mrb[0].mxu0
      %v1121 = vpop.f32.mrb[0].mxu0
      %v1122 = vadd.f32 0.0, %v1121
      %v1123 = vpop.f32.mrb[0].mxu0
      %1124 = vmatprep.mubr.bf16.mxu0 %v1011
      %1125 = vmatmul.mubr.bf16.gmra.mrb[0].mxu0 %v1010
      %v1126 = vpop.f32.mrb[0].mxu0
      %v1127 = vadd.f32 0.0, %v1126
      %v1128 = vpop.f32.mrb[0].mxu0
      %v1129 = vpop.f32.mrb[0].mxu0
      %v1130 = vadd.f32 0.0, %v1129
      %v1131 = vpop.f32.mrb[0].mxu0
      %1132 = vmatprep.mubr.bf16.mxu0 %v1013
      %1133 = vmatmul.mubr.bf16.gmra.mrb[0].mxu0 %v1012
      %v1134 = vpop.f32.mrb[0].mxu0
      %v1135 = vadd.f32 0.0, %v1134
      %v1136 = vpop.f32.mrb[0].mxu0
      %v1137 = vpop.f32.mrb[0].mxu0
      %v1138 = vadd.f32 0.0, %v1137
      %v1139 = vpop.f32.mrb[0].mxu0
      %1140 = vmatprep.mubr.bf16.mxu0 %v1015
      %1141 = vmatmul.mubr.bf16.gmra.mrb[0].mxu0 %v1014
      %v1142 = vpop.f32.mrb[0].mxu0
      %v1143 = vadd.f32 0.0, %v1142
      %v1144 = vpop.f32.mrb[0].mxu0
      %v1145 = vpop.f32.mrb[0].mxu0
      %v1146 = vadd.f32 0.0, %v1145
      %v1147 = vpop.f32.mrb[0].mxu0
      %1148 = vmatprep.mubr.bf16.mxu0 %v1017
      %1149 = vmatmul.mubr.bf16.gmra.mrb[0].mxu0 %v1016
      %v1150 = vpop.f32.mrb[0].mxu0
      %v1151 = vadd.f32 0.0, %v1150
      %v1152 = vpop.f32.mrb[0].mxu0
      %v1153 = vpop.f32.mrb[0].mxu0
      %v1154 = vadd.f32 0.0, %v1153
      %v1155 = vpop.f32.mrb[0].mxu0
      %1156 = vmatprep.mubr.bf16.mxu0 %v1019
      %1157 = vmatmul.mubr.bf16.gmra.mrb[0].mxu0 %v1018
      %v1158 = vpop.f32.mrb[0].mxu0
      %v1159 = vadd.f32 0.0, %v1158
      %v1160 = vpop.f32.mrb[0].mxu0
      %v1161 = vpop.f32.mrb[0].mxu0
      %v1162 = vadd.f32 0.0, %v1161
      %v1163 = vpop.f32.mrb[0].mxu0
      %1164 = vmatprep.mubr.bf16.mxu0 %v1021
      %1165 = vmatmul.mubr.bf16.gmra.mrb[0].mxu0 %v1020
      %v1166 = vpop.f32.mrb[0].mxu0
      %v1167 = vadd.f32 0.0, %v1166
      %v1168 = vpop.f32.mrb[0].mxu0
      %v1169 = vpop.f32.mrb[0].mxu0
      %v1170 = vadd.f32 0.0, %v1169
      %v1171 = vpop.f32.mrb[0].mxu0
      %1172 = vmatprep.mubr.bf16.mxu0 %v1023
      %1173 = vmatmul.mubr.bf16.gmra.mrb[0].mxu0 %v1022
      %v1174 = vpop.f32.mrb[0].mxu0
      %v1175 = vadd.f32 0.0, %v1174
      %v1176 = vpop.f32.mrb[0].mxu0
      %v1177 = vpop.f32.mrb[0].mxu0
      %v1178 = vadd.f32 0.0, %v1177
      %v1179 = vpop.f32.mrb[0].mxu0
      %1180 = vmatprep.mubr.bf16.mxu0 %v1025
      %1181 = vmatmul.mubr.bf16.gmra.mrb[0].mxu0 %v1024
      %v1182 = vpop.f32.mrb[0].mxu0
      %v1183 = vadd.f32 0.0, %v1182
      %v1184 = vpop.f32.mrb[0].mxu0
      %v1185 = vpop.f32.mrb[0].mxu0
      %v1186 = vpop.f32.mrb[0].mxu0
      %1187 = vdwg.mxu0
      %1188 = vst [vmem:[%s231] sm:$0xff] %v1087
      %1189 = vst [vmem:[%s231 + $0x8] sm:$0xff] %v1090
      %1190 = vst [vmem:[%s231 + $0x10] sm:$0xff] %v1095
      %1191 = vst [vmem:[%s231 + $0x18] sm:$0xff] %v1098
      %1192 = vst [vmem:[%s231 + $0x20] sm:$0xff] %v1103
      %1193 = vst [vmem:[%s231 + $0x28] sm:$0xff] %v1106
      %1194 = vst [vmem:[%s231 + $0x30] sm:$0xff] %v1111
      %1195 = vst [vmem:[%s231 + $0x38] sm:$0xff] %v1114
      %1196 = vst [vmem:[%s231 + $0x40] sm:$0xff] %v1119
      %1197 = vst [vmem:[%s231 + $0x48] sm:$0xff] %v1122
      %1198 = vst [vmem:[%s231 + $0x50] sm:$0xff] %v1127
      %1199 = vst [vmem:[%s231 + $0x58] sm:$0xff] %v1130
      %1200 = vst [vmem:[%s231 + $0x60] sm:$0xff] %v1135
      %1201 = vst [vmem:[%s231 + $0x68] sm:$0xff] %v1138
      %1202 = vst [vmem:[%s231 + $0x70] sm:$0xff] %v1143
      %1203 = vst [vmem:[%s231 + $0x78] sm:$0xff] %v1146
      %1204 = vst [vmem:[%s231 + $0x80] sm:$0xff] %v1151
      %1205 = vst [vmem:[%s231 + $0x88] sm:$0xff] %v1154
      %1206 = vst [vmem:[%s231 + $0x90] sm:$0xff] %v1159
      %1207 = vst [vmem:[%s231 + $0x98] sm:$0xff] %v1162
      %1208 = vst [vmem:[%s231 + $0xa0] sm:$0xff] %v1167
      %1209 = vst [vmem:[%s231 + $0xa8] sm:$0xff] %v1170
      %1210 = vst [vmem:[%s231 + $0xb0] sm:$0xff] %v1175
      %1211 = vst [vmem:[%s231 + $0xb8] sm:$0xff] %v1178
      %1212 = vst [vmem:[%s231 + $0xc0] sm:$0xf] %v1183
      %s1213 = scalar_lea.vmem %s224, 100
      %v1214 = vld [vmem:[%s1213] sm:$0xf]
      %v1215 = vld [vmem:[%s1213 + $0x4] sm:$0xf]
      %v1216 = vld [vmem:[%s1213 + $0x8] sm:$0xf]
      %v1217 = vld [vmem:[%s1213 + $0xc] sm:$0xf]
      %v1218 = vld [vmem:[%s1213 + $0x10] sm:$0xf]
      %v1219 = vld [vmem:[%s1213 + $0x14] sm:$0xf]
      %v1220 = vld [vmem:[%s1213 + $0x18] sm:$0xf]
      %v1221 = vld [vmem:[%s1213 + $0x1c] sm:$0xf]
      %v1222 = vld [vmem:[%s1213 + $0x20] sm:$0xf]
      %v1223 = vld [vmem:[%s1213 + $0x24] sm:$0xf]
      %v1224 = vld [vmem:[%s1213 + $0x28] sm:$0xf]
      %v1225 = vld [vmem:[%s1213 + $0x2c] sm:$0xf]
      %v1226 = vld [vmem:[%s1213 + $0x30] sm:$0xf]
      %v1227 = vld [vmem:[%s1213 + $0x34] sm:$0xf]
      %v1228 = vld [vmem:[%s1213 + $0x38] sm:$0xf]
      %v1229 = vld [vmem:[%s1213 + $0x3c] sm:$0xf]
      %v1230 = vld [vmem:[%s1213 + $0x40] sm:$0xf]
      %v1231 = vld [vmem:[%s1213 + $0x44] sm:$0xf]
      %v1232 = vld [vmem:[%s1213 + $0x48] sm:$0xf]
      %v1233 = vld [vmem:[%s1213 + $0x4c] sm:$0xf]
      %v1234 = vld [vmem:[%s1213 + $0x50] sm:$0xf]
      %v1235 = vld [vmem:[%s1213 + $0x54] sm:$0xf]
      %v1236 = vld [vmem:[%s1213 + $0x58] sm:$0xf]
      %v1237 = vld [vmem:[%s1213 + $0x5c] sm:$0xf]
      %v1238 = vld [vmem:[%s1213 + $0x60] sm:$0x3]
      %v1264 = vunpack.c.l.b16 %v1214
      %v1265 = vunpack.c.l.b16 %v1215
      %v1266 = vunpack.c.l.b16 %v1216
      %v1267 = vunpack.c.l.b16 %v1217
      %v1268 = vunpack.c.l.b16 %v1218
      %v1269 = vunpack.c.l.b16 %v1219
      %v1270 = vunpack.c.l.b16 %v1220
      %v1271 = vunpack.c.l.b16 %v1221
      %v1272 = vunpack.c.l.b16 %v1222
      %v1273 = vunpack.c.l.b16 %v1223
      %v1274 = vunpack.c.l.b16 %v1224
      %v1275 = vunpack.c.l.b16 %v1225
      %v1276 = vunpack.c.l.b16 %v1226
      %v1277 = vunpack.c.l.b16 %v1227
      %v1278 = vunpack.c.l.b16 %v1228
      %v1279 = vunpack.c.l.b16 %v1229
      %v1280 = vunpack.c.l.b16 %v1230
      %v1281 = vunpack.c.l.b16 %v1231
      %v1282 = vunpack.c.l.b16 %v1232
      %v1283 = vunpack.c.l.b16 %v1233
      %v1284 = vunpack.c.l.b16 %v1234
      %v1285 = vunpack.c.l.b16 %v1235
      %v1286 = vunpack.c.l.b16 %v1236
      %v1287 = vunpack.c.l.b16 %v1237
      %v1288 = vunpack.c.l.b16 %v1238
      %v1289 = vpack.c.b16 %v1265, %v1264
      %v1290 = vpack.c.b16 %v1267, %v1266
      %v1291 = vpack.c.b16 %v1269, %v1268
      %v1292 = vpack.c.b16 %v1271, %v1270
      %v1293 = vpack.c.b16 %v1273, %v1272
      %v1294 = vpack.c.b16 %v1275, %v1274
      %v1295 = vpack.c.b16 %v1277, %v1276
      %v1296 = vpack.c.b16 %v1279, %v1278
      %v1297 = vpack.c.b16 %v1281, %v1280
      %v1298 = vpack.c.b16 %v1283, %v1282
      %v1299 = vpack.c.b16 %v1285, %v1284
      %v1300 = vpack.c.b16 %v1287, %v1286
      %v1301 = vpack.c.b16 %v1288, %v1288
      %v1315 = vsel %vm648, %v1301, 0
      %1317 = vmatprep.subr.bf16.mxu0 0
      %1318 = vmatpush1.bf16.msra.mxu0 %v1289
      %1319 = vmatprep.subr.bf16.mxu0 0
      %1320 = vmatpush1.bf16.msra.mxu0 %v1290
      %1321 = vmatprep.subr.bf16.mxu0 0
      %1322 = vmatpush1.bf16.msra.mxu0 %v1291
      %1323 = vmatprep.subr.bf16.mxu0 0
      %1324 = vmatpush1.bf16.msra.mxu0 %v1292
      %1325 = vmatprep.subr.bf16.mxu0 0
      %1326 = vmatpush1.bf16.msra.mxu0 %v1293
      %1327 = vmatprep.subr.bf16.mxu0 0
      %1328 = vmatpush1.bf16.msra.mxu0 %v1294
      %1329 = vmatprep.subr.bf16.mxu0 0
      %1330 = vmatpush1.bf16.msra.mxu0 %v1295
      %1331 = vmatprep.subr.bf16.mxu0 0
      %1332 = vmatpush1.bf16.msra.mxu0 %v1296
      %1333 = vmatprep.subr.bf16.mxu0 0
      %1334 = vmatpush1.bf16.msra.mxu0 %v1297
      %1335 = vmatprep.subr.bf16.mxu0 0
      %1336 = vmatpush1.bf16.msra.mxu0 %v1298
      %1337 = vmatprep.subr.bf16.mxu0 0
      %1338 = vmatpush1.bf16.msra.mxu0 %v1299
      %1339 = vmatprep.subr.bf16.mxu0 0
      %1340 = vmatpush1.bf16.msra.mxu0 %v1300
      %1341 = vmatprep.subr.bf16.mxu0 0
      %1342 = vmatpush1.bf16.msra.mxu0 %v1315
      %1343 = vmatprep.subr.bf16.mxu0 0
      %1344 = vmatpush1.bf16.msra.mxu0 0
      %1345 = vmatprep.subr.bf16.mxu0 0
      %1346 = vmatpush1.bf16.msra.mxu0 0
      %1347 = vmatprep.subr.bf16.mxu0 0
      %1348 = vmatpush1.bf16.msra.mxu0 0
      %1349 = vmatprep.mubr.bf16.mxu0 %v601
      %1350 = vmatmul.mubr.bf16.gmra.mrb[0].mxu0 %v476
      %v1351 = vpop.f32.mrb[0].mxu0
      %v1352 = vadd.f32 0.0, %v1351
      %v1353 = vpop.f32.mrb[0].mxu0
      %v1354 = vpop.f32.mrb[0].mxu0
      %v1355 = vadd.f32 0.0, %v1354
      %v1356 = vpop.f32.mrb[0].mxu0
      %1357 = vmatprep.mubr.bf16.mxu0 %v604
      %1358 = vmatmul.mubr.bf16.gmra.mrb[0].mxu0 %v478
      %v1359 = vpop.f32.mrb[0].mxu0
      %v1360 = vadd.f32 0.0, %v1359
      %v1361 = vpop.f32.mrb[0].mxu0
      %v1362 = vpop.f32.mrb[0].mxu0
      %v1363 = vadd.f32 0.0, %v1362
      %v1364 = vpop.f32.mrb[0].mxu0
      %1365 = vmatprep.mubr.bf16.mxu0 %v607
      %1366 = vmatmul.mubr.bf16.gmra.mrb[0].mxu0 %v480
      %v1367 = vpop.f32.mrb[0].mxu0
      %v1368 = vadd.f32 0.0, %v1367
      %v1369 = vpop.f32.mrb[0].mxu0
      %v1370 = vpop.f32.mrb[0].mxu0
      %v1371 = vadd.f32 0.0, %v1370
      %v1372 = vpop.f32.mrb[0].mxu0
      %1373 = vmatprep.mubr.bf16.mxu0 %v610
      %1374 = vmatmul.mubr.bf16.gmra.mrb[0].mxu0 %v482
      %v1375 = vpop.f32.mrb[0].mxu0
      %v1376 = vadd.f32 0.0, %v1375
      %v1377 = vpop.f32.mrb[0].mxu0
      %v1378 = vpop.f32.mrb[0].mxu0
      %v1379 = vadd.f32 0.0, %v1378
      %v1380 = vpop.f32.mrb[0].mxu0
      %1381 = vmatprep.mubr.bf16.mxu0 %v613
      %1382 = vmatmul.mubr.bf16.gmra.mrb[0].mxu0 %v484
      %v1383 = vpop.f32.mrb[0].mxu0
      %v1384 = vadd.f32 0.0, %v1383
      %v1385 = vpop.f32.mrb[0].mxu0
      %v1386 = vpop.f32.mrb[0].mxu0
      %v1387 = vadd.f32 0.0, %v1386
      %v1388 = vpop.f32.mrb[0].mxu0
      %1389 = vmatprep.mubr.bf16.mxu0 %v616
      %1390 = vmatmul.mubr.bf16.gmra.mrb[0].mxu0 %v486
      %v1391 = vpop.f32.mrb[0].mxu0
      %v1392 = vadd.f32 0.0, %v1391
      %v1393 = vpop.f32.mrb[0].mxu0
      %v1394 = vpop.f32.mrb[0].mxu0
      %v1395 = vadd.f32 0.0, %v1394
      %v1396 = vpop.f32.mrb[0].mxu0
      %1397 = vmatprep.mubr.bf16.mxu0 %v619
      %1398 = vmatmul.mubr.bf16.gmra.mrb[0].mxu0 %v488
      %v1399 = vpop.f32.mrb[0].mxu0
      %v1400 = vadd.f32 0.0, %v1399
      %v1401 = vpop.f32.mrb[0].mxu0
      %v1402 = vpop.f32.mrb[0].mxu0
      %v1403 = vadd.f32 0.0, %v1402
      %v1404 = vpop.f32.mrb[0].mxu0
      %1405 = vmatprep.mubr.bf16.mxu0 %v622
      %1406 = vmatmul.mubr.bf16.gmra.mrb[0].mxu0 %v490
      %v1407 = vpop.f32.mrb[0].mxu0
      %v1408 = vadd.f32 0.0, %v1407
      %v1409 = vpop.f32.mrb[0].mxu0
      %v1410 = vpop.f32.mrb[0].mxu0
      %v1411 = vadd.f32 0.0, %v1410
      %v1412 = vpop.f32.mrb[0].mxu0
      %1413 = vmatprep.mubr.bf16.mxu0 %v625
      %1414 = vmatmul.mubr.bf16.gmra.mrb[0].mxu0 %v492
      %v1415 = vpop.f32.mrb[0].mxu0
      %v1416 = vadd.f32 0.0, %v1415
      %v1417 = vpop.f32.mrb[0].mxu0
      %v1418 = vpop.f32.mrb[0].mxu0
      %v1419 = vadd.f32 0.0, %v1418
      %v1420 = vpop.f32.mrb[0].mxu0
      %1421 = vmatprep.mubr.bf16.mxu0 %v628
      %1422 = vmatmul.mubr.bf16.gmra.mrb[0].mxu0 %v494
      %v1423 = vpop.f32.mrb[0].mxu0
      %v1424 = vadd.f32 0.0, %v1423
      %v1425 = vpop.f32.mrb[0].mxu0
      %v1426 = vpop.f32.mrb[0].mxu0
      %v1427 = vadd.f32 0.0, %v1426
      %v1428 = vpop.f32.mrb[0].mxu0
      %1429 = vmatprep.mubr.bf16.mxu0 %v631
      %1430 = vmatmul.mubr.bf16.gmra.mrb[0].mxu0 %v496
      %v1431 = vpop.f32.mrb[0].mxu0
      %v1432 = vadd.f32 0.0, %v1431
      %v1433 = vpop.f32.mrb[0].mxu0
      %v1434 = vpop.f32.mrb[0].mxu0
      %v1435 = vadd.f32 0.0, %v1434
      %v1436 = vpop.f32.mrb[0].mxu0
      %1437 = vmatprep.mubr.bf16.mxu0 %v634
      %1438 = vmatmul.mubr.bf16.gmra.mrb[0].mxu0 %v498
      %v1439 = vpop.f32.mrb[0].mxu0
      %v1440 = vadd.f32 0.0, %v1439
      %v1441 = vpop.f32.mrb[0].mxu0
      %v1442 = vpop.f32.mrb[0].mxu0
      %v1443 = vadd.f32 0.0, %v1442
      %v1444 = vpop.f32.mrb[0].mxu0
      %1445 = vmatprep.mubr.bf16.mxu0 %v637
      %1446 = vmatmul.mubr.bf16.gmra.mrb[0].mxu0 %v500
      %v1447 = vpop.f32.mrb[0].mxu0
      %v1448 = vadd.f32 0.0, %v1447
      %v1449 = vpop.f32.mrb[0].mxu0
      %v1450 = vpop.f32.mrb[0].mxu0
      %v1451 = vadd.f32 0.0, %v1450
      %v1452 = vpop.f32.mrb[0].mxu0
      %1453 = vmatprep.mubr.bf16.mxu0 %v640
      %1454 = vmatmul.mubr.bf16.gmra.mrb[0].mxu0 %v502
      %v1455 = vpop.f32.mrb[0].mxu0
      %v1456 = vadd.f32 0.0, %v1455
      %v1457 = vpop.f32.mrb[0].mxu0
      %v1458 = vpop.f32.mrb[0].mxu0
      %v1459 = vadd.f32 0.0, %v1458
      %v1460 = vpop.f32.mrb[0].mxu0
      %1461 = vmatprep.mubr.bf16.mxu0 %v643
      %1462 = vmatmul.mubr.bf16.gmra.mrb[0].mxu0 %v504
      %v1463 = vpop.f32.mrb[0].mxu0
      %v1464 = vadd.f32 0.0, %v1463
      %v1465 = vpop.f32.mrb[0].mxu0
      %v1466 = vpop.f32.mrb[0].mxu0
      %v1467 = vadd.f32 0.0, %v1466
      %v1468 = vpop.f32.mrb[0].mxu0
      %1469 = vmatprep.mubr.bf16.mxu0 %v646
      %1470 = vmatmul.mubr.bf16.gmra.mrb[0].mxu0 %v506
      %v1471 = vpop.f32.mrb[0].mxu0
      %v1472 = vadd.f32 0.0, %v1471
      %v1473 = vpop.f32.mrb[0].mxu0
      %v1474 = vpop.f32.mrb[0].mxu0
      %v1475 = vadd.f32 0.0, %v1474
      %v1476 = vpop.f32.mrb[0].mxu0
      %1477 = vdwg.mxu0
      %v1478 = vmul.f32 %v1352, %v291
      %v1479 = vmul.f32 %v1355, %v292
      %v1480 = vmul.f32 %v1360, %v293
      %v1481 = vmul.f32 %v1363, %v294
      %v1482 = vmul.f32 %v1368, %v295
      %v1483 = vmul.f32 %v1371, %v296
      %v1484 = vmul.f32 %v1376, %v297
      %v1485 = vmul.f32 %v1379, %v298
      %v1486 = vmul.f32 %v1384, %v299
      %v1487 = vmul.f32 %v1387, %v300
      %v1488 = vmul.f32 %v1392, %v301
      %v1489 = vmul.f32 %v1395, %v302
      %v1490 = vmul.f32 %v1400, %v303
      %v1491 = vmul.f32 %v1403, %v304
      %v1492 = vmul.f32 %v1408, %v305
      %v1493 = vmul.f32 %v1411, %v306
      %v1494 = vmul.f32 %v1416, %v307
      %v1495 = vmul.f32 %v1419, %v308
      %v1496 = vmul.f32 %v1424, %v309
      %v1497 = vmul.f32 %v1427, %v310
      %v1498 = vmul.f32 %v1432, %v311
      %v1499 = vmul.f32 %v1435, %v312
      %v1500 = vmul.f32 %v1440, %v313
      %v1501 = vmul.f32 %v1443, %v314
      %v1502 = vmul.f32 %v1448, %v315
      %v1503 = vmul.f32 %v1451, %v316
      %v1504 = vmul.f32 %v1456, %v317
      %v1505 = vmul.f32 %v1459, %v318
      %v1506 = vmul.f32 %v1464, %v319
      %v1507 = vmul.f32 %v1467, %v320
      %v1508 = vmul.f32 %v1472, %v321
      %v1509 = vmul.f32 %v1475, %v322
      %v1510 = vmul.f32 %v1416, %v323
      %v1511 = vmul.f32 %v1419, %v324
      %v1512 = vmul.f32 %v1424, %v325
      %v1513 = vmul.f32 %v1427, %v326
      %v1514 = vmul.f32 %v1432, %v327
      %v1515 = vmul.f32 %v1435, %v328
      %v1516 = vmul.f32 %v1440, %v329
      %v1517 = vmul.f32 %v1443, %v330
      %v1518 = vmul.f32 %v1448, %v331
      %v1519 = vmul.f32 %v1451, %v332
      %v1520 = vmul.f32 %v1456, %v333
      %v1521 = vmul.f32 %v1459, %v334
      %v1522 = vmul.f32 %v1464, %v335
      %v1523 = vmul.f32 %v1467, %v336
      %v1524 = vmul.f32 %v1472, %v337
      %v1525 = vmul.f32 %v1475, %v338
      %v1526 = vmul.f32 %v1352, %v339
      %v1527 = vmul.f32 %v1355, %v340
      %v1528 = vmul.f32 %v1360, %v341
      %v1529 = vmul.f32 %v1363, %v342
      %v1530 = vmul.f32 %v1368, %v343
      %v1531 = vmul.f32 %v1371, %v344
      %v1532 = vmul.f32 %v1376, %v345
      %v1533 = vmul.f32 %v1379, %v346
      %v1534 = vmul.f32 %v1384, %v347
      %v1535 = vmul.f32 %v1387, %v348
      %v1536 = vmul.f32 %v1392, %v349
      %v1537 = vmul.f32 %v1395, %v350
      %v1538 = vmul.f32 %v1400, %v351
      %v1539 = vmul.f32 %v1403, %v352
      %v1540 = vmul.f32 %v1408, %v353
      %v1541 = vmul.f32 %v1411, %v354
      %v1542 = vadd.f32 %v1478, %v1510
      %v1543 = vadd.f32 %v1479, %v1511
      %v1544 = vadd.f32 %v1480, %v1512
      %v1545 = vadd.f32 %v1481, %v1513
      %v1546 = vadd.f32 %v1482, %v1514
      %v1547 = vadd.f32 %v1483, %v1515
      %v1548 = vadd.f32 %v1484, %v1516
      %v1549 = vadd.f32 %v1485, %v1517
      %v1550 = vadd.f32 %v1486, %v1518
      %v1551 = vadd.f32 %v1487, %v1519
      %v1552 = vadd.f32 %v1488, %v1520
      %v1553 = vadd.f32 %v1489, %v1521
      %v1554 = vadd.f32 %v1490, %v1522
      %v1555 = vadd.f32 %v1491, %v1523
      %v1556 = vadd.f32 %v1492, %v1524
      %v1557 = vadd.f32 %v1493, %v1525
      %v1558 = vadd.f32 %v1494, %v1526
      %v1559 = vadd.f32 %v1495, %v1527
      %v1560 = vadd.f32 %v1496, %v1528
      %v1561 = vadd.f32 %v1497, %v1529
      %v1562 = vadd.f32 %v1498, %v1530
      %v1563 = vadd.f32 %v1499, %v1531
      %v1564 = vadd.f32 %v1500, %v1532
      %v1565 = vadd.f32 %v1501, %v1533
      %v1566 = vadd.f32 %v1502, %v1534
      %v1567 = vadd.f32 %v1503, %v1535
      %v1568 = vadd.f32 %v1504, %v1536
      %v1569 = vadd.f32 %v1505, %v1537
      %v1570 = vadd.f32 %v1506, %v1538
      %v1571 = vadd.f32 %v1507, %v1539
      %v1572 = vadd.f32 %v1508, %v1540
      %v1573 = vadd.f32 %v1509, %v1541
      %v1574 = vpack.c.bf16 %v1543, %v1542
      %v1575 = vpack.c.bf16 %v1545, %v1544
      %v1576 = vpack.c.bf16 %v1547, %v1546
      %v1577 = vpack.c.bf16 %v1549, %v1548
      %v1578 = vpack.c.bf16 %v1551, %v1550
      %v1579 = vpack.c.bf16 %v1553, %v1552
      %v1580 = vpack.c.bf16 %v1555, %v1554
      %v1581 = vpack.c.bf16 %v1557, %v1556
      %v1582 = vpack.c.bf16 %v1559, %v1558
      %v1583 = vpack.c.bf16 %v1561, %v1560
      %v1584 = vpack.c.bf16 %v1563, %v1562
      %v1585 = vpack.c.bf16 %v1565, %v1564
      %v1586 = vpack.c.bf16 %v1567, %v1566
      %v1587 = vpack.c.bf16 %v1569, %v1568
      %v1588 = vpack.c.bf16 %v1571, %v1570
      %v1589 = vpack.c.bf16 %v1573, %v1572
      %1590 = vmatprep.subr.bf16.mxu0 0
      %1591 = vmatpush1.bf16.msra.mxu0 %v1574
      %1592 = vmatprep.subr.bf16.mxu0 0
      %1593 = vmatpush1.bf16.msra.mxu0 %v1575
      %1594 = vmatprep.subr.bf16.mxu0 0
      %1595 = vmatpush1.bf16.msra.mxu0 %v1576
      %1596 = vmatprep.subr.bf16.mxu0 0
      %1597 = vmatpush1.bf16.msra.mxu0 %v1577
      %1598 = vmatprep.subr.bf16.mxu0 0
      %1599 = vmatpush1.bf16.msra.mxu0 %v1578
      %1600 = vmatprep.subr.bf16.mxu0 0
      %1601 = vmatpush1.bf16.msra.mxu0 %v1579
      %1602 = vmatprep.subr.bf16.mxu0 0
      %1603 = vmatpush1.bf16.msra.mxu0 %v1580
      %1604 = vmatprep.subr.bf16.mxu0 0
      %1605 = vmatpush1.bf16.msra.mxu0 %v1581
      %1606 = vmatprep.subr.bf16.mxu0 0
      %1607 = vmatpush1.bf16.msra.mxu0 %v1582
      %1608 = vmatprep.subr.bf16.mxu0 0
      %1609 = vmatpush1.bf16.msra.mxu0 %v1583
      %1610 = vmatprep.subr.bf16.mxu0 0
      %1611 = vmatpush1.bf16.msra.mxu0 %v1584
      %1612 = vmatprep.subr.bf16.mxu0 0
      %1613 = vmatpush1.bf16.msra.mxu0 %v1585
      %1614 = vmatprep.subr.bf16.mxu0 0
      %1615 = vmatpush1.bf16.msra.mxu0 %v1586
      %1616 = vmatprep.subr.bf16.mxu0 0
      %1617 = vmatpush1.bf16.msra.mxu0 %v1587
      %1618 = vmatprep.subr.bf16.mxu0 0
      %1619 = vmatpush1.bf16.msra.mxu0 %v1588
      %1620 = vmatprep.subr.bf16.mxu0 0
      %1621 = vmatpush1.bf16.msra.mxu0 %v1589
      %1622 = vmatprep.mubr.bf16.mxu0 %v1001
      %1623 = vmatmul.mubr.bf16.gmra.mrb[0].mxu0 %v1000
      %v1624 = vpop.f32.mrb[0].mxu0
      %v1625 = vadd.f32 0.0, %v1624
      %v1626 = vpop.f32.mrb[0].mxu0
      %v1627 = vpop.f32.mrb[0].mxu0
      %v1628 = vadd.f32 0.0, %v1627
      %v1629 = vpop.f32.mrb[0].mxu0
      %1630 = vmatprep.mubr.bf16.mxu0 %v1003
      %1631 = vmatmul.mubr.bf16.gmra.mrb[0].mxu0 %v1002
      %v1632 = vpop.f32.mrb[0].mxu0
      %v1633 = vadd.f32 0.0, %v1632
      %v1634 = vpop.f32.mrb[0].mxu0
      %v1635 = vpop.f32.mrb[0].mxu0
      %v1636 = vadd.f32 0.0, %v1635
      %v1637 = vpop.f32.mrb[0].mxu0
      %1638 = vmatprep.mubr.bf16.mxu0 %v1005
      %1639 = vmatmul.mubr.bf16.gmra.mrb[0].mxu0 %v1004
      %v1640 = vpop.f32.mrb[0].mxu0
      %v1641 = vadd.f32 0.0, %v1640
      %v1642 = vpop.f32.mrb[0].mxu0
      %v1643 = vpop.f32.mrb[0].mxu0
      %v1644 = vadd.f32 0.0, %v1643
      %v1645 = vpop.f32.mrb[0].mxu0
      %1646 = vmatprep.mubr.bf16.mxu0 %v1007
      %1647 = vmatmul.mubr.bf16.gmra.mrb[0].mxu0 %v1006
      %v1648 = vpop.f32.mrb[0].mxu0
      %v1649 = vadd.f32 0.0, %v1648
      %v1650 = vpop.f32.mrb[0].mxu0
      %v1651 = vpop.f32.mrb[0].mxu0
      %v1652 = vadd.f32 0.0, %v1651
      %v1653 = vpop.f32.mrb[0].mxu0
      %1654 = vmatprep.mubr.bf16.mxu0 %v1009
      %1655 = vmatmul.mubr.bf16.gmra.mrb[0].mxu0 %v1008
      %v1656 = vpop.f32.mrb[0].mxu0
      %v1657 = vadd.f32 0.0, %v1656
      %v1658 = vpop.f32.mrb[0].mxu0
      %v1659 = vpop.f32.mrb[0].mxu0
      %v1660 = vadd.f32 0.0, %v1659
      %v1661 = vpop.f32.mrb[0].mxu0
      %1662 = vmatprep.mubr.bf16.mxu0 %v1011
      %1663 = vmatmul.mubr.bf16.gmra.mrb[0].mxu0 %v1010
      %v1664 = vpop.f32.mrb[0].mxu0
      %v1665 = vadd.f32 0.0, %v1664
      %v1666 = vpop.f32.mrb[0].mxu0
      %v1667 = vpop.f32.mrb[0].mxu0
      %v1668 = vadd.f32 0.0, %v1667
      %v1669 = vpop.f32.mrb[0].mxu0
      %1670 = vmatprep.mubr.bf16.mxu0 %v1013
      %1671 = vmatmul.mubr.bf16.gmra.mrb[0].mxu0 %v1012
      %v1672 = vpop.f32.mrb[0].mxu0
      %v1673 = vadd.f32 0.0, %v1672
      %v1674 = vpop.f32.mrb[0].mxu0
      %v1675 = vpop.f32.mrb[0].mxu0
      %v1676 = vadd.f32 0.0, %v1675
      %v1677 = vpop.f32.mrb[0].mxu0
      %1678 = vmatprep.mubr.bf16.mxu0 %v1015
      %1679 = vmatmul.mubr.bf16.gmra.mrb[0].mxu0 %v1014
      %v1680 = vpop.f32.mrb[0].mxu0
      %v1681 = vadd.f32 0.0, %v1680
      %v1682 = vpop.f32.mrb[0].mxu0
      %v1683 = vpop.f32.mrb[0].mxu0
      %v1684 = vadd.f32 0.0, %v1683
      %v1685 = vpop.f32.mrb[0].mxu0
      %1686 = vmatprep.mubr.bf16.mxu0 %v1017
      %1687 = vmatmul.mubr.bf16.gmra.mrb[0].mxu0 %v1016
      %v1688 = vpop.f32.mrb[0].mxu0
      %v1689 = vadd.f32 0.0, %v1688
      %v1690 = vpop.f32.mrb[0].mxu0
      %v1691 = vpop.f32.mrb[0].mxu0
      %v1692 = vadd.f32 0.0, %v1691
      %v1693 = vpop.f32.mrb[0].mxu0
      %1694 = vmatprep.mubr.bf16.mxu0 %v1019
      %1695 = vmatmul.mubr.bf16.gmra.mrb[0].mxu0 %v1018
      %v1696 = vpop.f32.mrb[0].mxu0
      %v1697 = vadd.f32 0.0, %v1696
      %v1698 = vpop.f32.mrb[0].mxu0
      %v1699 = vpop.f32.mrb[0].mxu0
      %v1700 = vadd.f32 0.0, %v1699
      %v1701 = vpop.f32.mrb[0].mxu0
      %1702 = vmatprep.mubr.bf16.mxu0 %v1021
      %1703 = vmatmul.mubr.bf16.gmra.mrb[0].mxu0 %v1020
      %v1704 = vpop.f32.mrb[0].mxu0
      %v1705 = vadd.f32 0.0, %v1704
      %v1706 = vpop.f32.mrb[0].mxu0
      %v1707 = vpop.f32.mrb[0].mxu0
      %v1708 = vadd.f32 0.0, %v1707
      %v1709 = vpop.f32.mrb[0].mxu0
      %1710 = vmatprep.mubr.bf16.mxu0 %v1023
      %1711 = vmatmul.mubr.bf16.gmra.mrb[0].mxu0 %v1022
      %v1712 = vpop.f32.mrb[0].mxu0
      %v1713 = vadd.f32 0.0, %v1712
      %v1714 = vpop.f32.mrb[0].mxu0
      %v1715 = vpop.f32.mrb[0].mxu0
      %v1716 = vadd.f32 0.0, %v1715
      %v1717 = vpop.f32.mrb[0].mxu0
      %1718 = vmatprep.mubr.bf16.mxu0 %v1025
      %1719 = vmatmul.mubr.bf16.gmra.mrb[0].mxu0 %v1024
      %v1720 = vpop.f32.mrb[0].mxu0
      %v1721 = vadd.f32 0.0, %v1720
      %v1722 = vpop.f32.mrb[0].mxu0
      %v1723 = vpop.f32.mrb[0].mxu0
      %v1724 = vpop.f32.mrb[0].mxu0
      %1725 = vdwg.mxu0
      %s1726 = scalar_lea.vmem %s231, 200
      %1727 = vst [vmem:[%s1726] sm:$0xff] %v1625
      %1728 = vst [vmem:[%s1726 + $0x8] sm:$0xff] %v1628
      %1729 = vst [vmem:[%s1726 + $0x10] sm:$0xff] %v1633
      %1730 = vst [vmem:[%s1726 + $0x18] sm:$0xff] %v1636
      %1731 = vst [vmem:[%s1726 + $0x20] sm:$0xff] %v1641
      %1732 = vst [vmem:[%s1726 + $0x28] sm:$0xff] %v1644
      %1733 = vst [vmem:[%s1726 + $0x30] sm:$0xff] %v1649
      %1734 = vst [vmem:[%s1726 + $0x38] sm:$0xff] %v1652
      %1735 = vst [vmem:[%s1726 + $0x40] sm:$0xff] %v1657
      %1736 = vst [vmem:[%s1726 + $0x48] sm:$0xff] %v1660
      %1737 = vst [vmem:[%s1726 + $0x50] sm:$0xff] %v1665
      %1738 = vst [vmem:[%s1726 + $0x58] sm:$0xff] %v1668
      %1739 = vst [vmem:[%s1726 + $0x60] sm:$0xff] %v1673
      %1740 = vst [vmem:[%s1726 + $0x68] sm:$0xff] %v1676
      %1741 = vst [vmem:[%s1726 + $0x70] sm:$0xff] %v1681
      %1742 = vst [vmem:[%s1726 + $0x78] sm:$0xff] %v1684
      %1743 = vst [vmem:[%s1726 + $0x80] sm:$0xff] %v1689
      %1744 = vst [vmem:[%s1726 + $0x88] sm:$0xff] %v1692
      %1745 = vst [vmem:[%s1726 + $0x90] sm:$0xff] %v1697
      %1746 = vst [vmem:[%s1726 + $0x98] sm:$0xff] %v1700
      %1747 = vst [vmem:[%s1726 + $0xa0] sm:$0xff] %v1705
      %1748 = vst [vmem:[%s1726 + $0xa8] sm:$0xff] %v1708
      %1749 = vst [vmem:[%s1726 + $0xb0] sm:$0xff] %v1713
      %1750 = vst [vmem:[%s1726 + $0xb8] sm:$0xff] %v1716
      %1751 = vst [vmem:[%s1726 + $0xc0] sm:$0xf] %v1721
      %s1752 = scalar_lea.vmem %s224, 200
      %v1753 = vld [vmem:[%s1752] sm:$0xf]
      %v1754 = vld [vmem:[%s1752 + $0x4] sm:$0xf]
      %v1755 = vld [vmem:[%s1752 + $0x8] sm:$0xf]
      %v1756 = vld [vmem:[%s1752 + $0xc] sm:$0xf]
      %v1757 = vld [vmem:[%s1752 + $0x10] sm:$0xf]
      %v1758 = vld [vmem:[%s1752 + $0x14] sm:$0xf]
      %v1759 = vld [vmem:[%s1752 + $0x18] sm:$0xf]
      %v1760 = vld [vmem:[%s1752 + $0x1c] sm:$0xf]
      %v1761 = vld [vmem:[%s1752 + $0x20] sm:$0xf]
      %v1762 = vld [vmem:[%s1752 + $0x24] sm:$0xf]
      %v1763 = vld [vmem:[%s1752 + $0x28] sm:$0xf]
      %v1764 = vld [vmem:[%s1752 + $0x2c] sm:$0xf]
      %v1765 = vld [vmem:[%s1752 + $0x30] sm:$0xf]
      %v1766 = vld [vmem:[%s1752 + $0x34] sm:$0xf]
      %v1767 = vld [vmem:[%s1752 + $0x38] sm:$0xf]
      %v1768 = vld [vmem:[%s1752 + $0x3c] sm:$0xf]
      %v1769 = vld [vmem:[%s1752 + $0x40] sm:$0xf]
      %v1770 = vld [vmem:[%s1752 + $0x44] sm:$0xf]
      %v1771 = vld [vmem:[%s1752 + $0x48] sm:$0xf]
      %v1772 = vld [vmem:[%s1752 + $0x4c] sm:$0xf]
      %v1773 = vld [vmem:[%s1752 + $0x50] sm:$0xf]
      %v1774 = vld [vmem:[%s1752 + $0x54] sm:$0xf]
      %v1775 = vld [vmem:[%s1752 + $0x58] sm:$0xf]
      %v1776 = vld [vmem:[%s1752 + $0x5c] sm:$0xf]
      %v1777 = vld [vmem:[%s1752 + $0x60] sm:$0x3]
      %v1803 = vunpack.c.l.b16 %v1753
      %v1804 = vunpack.c.l.b16 %v1754
      %v1805 = vunpack.c.l.b16 %v1755
      %v1806 = vunpack.c.l.b16 %v1756
      %v1807 = vunpack.c.l.b16 %v1757
      %v1808 = vunpack.c.l.b16 %v1758
      %v1809 = vunpack.c.l.b16 %v1759
      %v1810 = vunpack.c.l.b16 %v1760
      %v1811 = vunpack.c.l.b16 %v1761
      %v1812 = vunpack.c.l.b16 %v1762
      %v1813 = vunpack.c.l.b16 %v1763
      %v1814 = vunpack.c.l.b16 %v1764
      %v1815 = vunpack.c.l.b16 %v1765
      %v1816 = vunpack.c.l.b16 %v1766
      %v1817 = vunpack.c.l.b16 %v1767
      %v1818 = vunpack.c.l.b16 %v1768
      %v1819 = vunpack.c.l.b16 %v1769
      %v1820 = vunpack.c.l.b16 %v1770
      %v1821 = vunpack.c.l.b16 %v1771
      %v1822 = vunpack.c.l.b16 %v1772
      %v1823 = vunpack.c.l.b16 %v1773
      %v1824 = vunpack.c.l.b16 %v1774
      %v1825 = vunpack.c.l.b16 %v1775
      %v1826 = vunpack.c.l.b16 %v1776
      %v1827 = vunpack.c.l.b16 %v1777
      %v1828 = vpack.c.b16 %v1804, %v1803
      %v1829 = vpack.c.b16 %v1806, %v1805
      %v1830 = vpack.c.b16 %v1808, %v1807
      %v1831 = vpack.c.b16 %v1810, %v1809
      %v1832 = vpack.c.b16 %v1812, %v1811
      %v1833 = vpack.c.b16 %v1814, %v1813
      %v1834 = vpack.c.b16 %v1816, %v1815
      %v1835 = vpack.c.b16 %v1818, %v1817
      %v1836 = vpack.c.b16 %v1820, %v1819
      %v1837 = vpack.c.b16 %v1822, %v1821
      %v1838 = vpack.c.b16 %v1824, %v1823
      %v1839 = vpack.c.b16 %v1826, %v1825
      %v1840 = vpack.c.b16 %v1827, %v1827
      %v1854 = vsel %vm648, %v1840, 0
      %1856 = vmatprep.subr.bf16.mxu0 0
      %1857 = vmatpush1.bf16.msra.mxu0 %v1828
      %1858 = vmatprep.subr.bf16.mxu0 0
      %1859 = vmatpush1.bf16.msra.mxu0 %v1829
      %1860 = vmatprep.subr.bf16.mxu0 0
      %1861 = vmatpush1.bf16.msra.mxu0 %v1830
      %1862 = vmatprep.subr.bf16.mxu0 0
      %1863 = vmatpush1.bf16.msra.mxu0 %v1831
      %1864 = vmatprep.subr.bf16.mxu0 0
      %1865 = vmatpush1.bf16.msra.mxu0 %v1832
      %1866 = vmatprep.subr.bf16.mxu0 0
      %1867 = vmatpush1.bf16.msra.mxu0 %v1833
      %1868 = vmatprep.subr.bf16.mxu0 0
      %1869 = vmatpush1.bf16.msra.mxu0 %v1834
      %1870 = vmatprep.subr.bf16.mxu0 0
      %1871 = vmatpush1.bf16.msra.mxu0 %v1835
      %1872 = vmatprep.subr.bf16.mxu0 0
      %1873 = vmatpush1.bf16.msra.mxu0 %v1836
      %1874 = vmatprep.subr.bf16.mxu0 0
      %1875 = vmatpush1.bf16.msra.mxu0 %v1837
      %1876 = vmatprep.subr.bf16.mxu0 0
      %1877 = vmatpush1.bf16.msra.mxu0 %v1838
      %1878 = vmatprep.subr.bf16.mxu0 0
      %1879 = vmatpush1.bf16.msra.mxu0 %v1839
      %1880 = vmatprep.subr.bf16.mxu0 0
      %1881 = vmatpush1.bf16.msra.mxu0 %v1854
      %1882 = vmatprep.subr.bf16.mxu0 0
      %1883 = vmatpush1.bf16.msra.mxu0 0
      %1884 = vmatprep.subr.bf16.mxu0 0
      %1885 = vmatpush1.bf16.msra.mxu0 0
      %1886 = vmatprep.subr.bf16.mxu0 0
      %1887 = vmatpush1.bf16.msra.mxu0 0
      %1888 = vmatprep.mubr.bf16.mxu0 %v601
      %1889 = vmatmul.mubr.bf16.gmra.mrb[0].mxu0 %v476
      %v1890 = vpop.f32.mrb[0].mxu0
      %v1891 = vadd.f32 0.0, %v1890
      %v1892 = vpop.f32.mrb[0].mxu0
      %v1893 = vpop.f32.mrb[0].mxu0
      %v1894 = vadd.f32 0.0, %v1893
      %v1895 = vpop.f32.mrb[0].mxu0
      %1896 = vmatprep.mubr.bf16.mxu0 %v604
      %1897 = vmatmul.mubr.bf16.gmra.mrb[0].mxu0 %v478
      %v1898 = vpop.f32.mrb[0].mxu0
      %v1899 = vadd.f32 0.0, %v1898
      %v1900 = vpop.f32.mrb[0].mxu0
      %v1901 = vpop.f32.mrb[0].mxu0
      %v1902 = vadd.f32 0.0, %v1901
      %v1903 = vpop.f32.mrb[0].mxu0
      %1904 = vmatprep.mubr.bf16.mxu0 %v607
      %1905 = vmatmul.mubr.bf16.gmra.mrb[0].mxu0 %v480
      %v1906 = vpop.f32.mrb[0].mxu0
      %v1907 = vadd.f32 0.0, %v1906
      %v1908 = vpop.f32.mrb[0].mxu0
      %v1909 = vpop.f32.mrb[0].mxu0
      %v1910 = vadd.f32 0.0, %v1909
      %v1911 = vpop.f32.mrb[0].mxu0
      %1912 = vmatprep.mubr.bf16.mxu0 %v610
      %1913 = vmatmul.mubr.bf16.gmra.mrb[0].mxu0 %v482
      %v1914 = vpop.f32.mrb[0].mxu0
      %v1915 = vadd.f32 0.0, %v1914
      %v1916 = vpop.f32.mrb[0].mxu0
      %v1917 = vpop.f32.mrb[0].mxu0
      %v1918 = vadd.f32 0.0, %v1917
      %v1919 = vpop.f32.mrb[0].mxu0
      %1920 = vmatprep.mubr.bf16.mxu0 %v613
      %1921 = vmatmul.mubr.bf16.gmra.mrb[0].mxu0 %v484
      %v1922 = vpop.f32.mrb[0].mxu0
      %v1923 = vadd.f32 0.0, %v1922
      %v1924 = vpop.f32.mrb[0].mxu0
      %v1925 = vpop.f32.mrb[0].mxu0
      %v1926 = vadd.f32 0.0, %v1925
      %v1927 = vpop.f32.mrb[0].mxu0
      %1928 = vmatprep.mubr.bf16.mxu0 %v616
      %1929 = vmatmul.mubr.bf16.gmra.mrb[0].mxu0 %v486
      %v1930 = vpop.f32.mrb[0].mxu0
      %v1931 = vadd.f32 0.0, %v1930
      %v1932 = vpop.f32.mrb[0].mxu0
      %v1933 = vpop.f32.mrb[0].mxu0
      %v1934 = vadd.f32 0.0, %v1933
      %v1935 = vpop.f32.mrb[0].mxu0
      %1936 = vmatprep.mubr.bf16.mxu0 %v619
      %1937 = vmatmul.mubr.bf16.gmra.mrb[0].mxu0 %v488
      %v1938 = vpop.f32.mrb[0].mxu0
      %v1939 = vadd.f32 0.0, %v1938
      %v1940 = vpop.f32.mrb[0].mxu0
      %v1941 = vpop.f32.mrb[0].mxu0
      %v1942 = vadd.f32 0.0, %v1941
      %v1943 = vpop.f32.mrb[0].mxu0
      %1944 = vmatprep.mubr.bf16.mxu0 %v622
      %1945 = vmatmul.mubr.bf16.gmra.mrb[0].mxu0 %v490
      %v1946 = vpop.f32.mrb[0].mxu0
      %v1947 = vadd.f32 0.0, %v1946
      %v1948 = vpop.f32.mrb[0].mxu0
      %v1949 = vpop.f32.mrb[0].mxu0
      %v1950 = vadd.f32 0.0, %v1949
      %v1951 = vpop.f32.mrb[0].mxu0
      %1952 = vmatprep.mubr.bf16.mxu0 %v625
      %1953 = vmatmul.mubr.bf16.gmra.mrb[0].mxu0 %v492
      %v1954 = vpop.f32.mrb[0].mxu0
      %v1955 = vadd.f32 0.0, %v1954
      %v1956 = vpop.f32.mrb[0].mxu0
      %v1957 = vpop.f32.mrb[0].mxu0
      %v1958 = vadd.f32 0.0, %v1957
      %v1959 = vpop.f32.mrb[0].mxu0
      %1960 = vmatprep.mubr.bf16.mxu0 %v628
      %1961 = vmatmul.mubr.bf16.gmra.mrb[0].mxu0 %v494
      %v1962 = vpop.f32.mrb[0].mxu0
      %v1963 = vadd.f32 0.0, %v1962
      %v1964 = vpop.f32.mrb[0].mxu0
      %v1965 = vpop.f32.mrb[0].mxu0
      %v1966 = vadd.f32 0.0, %v1965
      %v1967 = vpop.f32.mrb[0].mxu0
      %1968 = vmatprep.mubr.bf16.mxu0 %v631
      %1969 = vmatmul.mubr.bf16.gmra.mrb[0].mxu0 %v496
      %v1970 = vpop.f32.mrb[0].mxu0
      %v1971 = vadd.f32 0.0, %v1970
      %v1972 = vpop.f32.mrb[0].mxu0
      %v1973 = vpop.f32.mrb[0].mxu0
      %v1974 = vadd.f32 0.0, %v1973
      %v1975 = vpop.f32.mrb[0].mxu0
      %1976 = vmatprep.mubr.bf16.mxu0 %v634
      %1977 = vmatmul.mubr.bf16.gmra.mrb[0].mxu0 %v498
      %v1978 = vpop.f32.mrb[0].mxu0
      %v1979 = vadd.f32 0.0, %v1978
      %v1980 = vpop.f32.mrb[0].mxu0
      %v1981 = vpop.f32.mrb[0].mxu0
      %v1982 = vadd.f32 0.0, %v1981
      %v1983 = vpop.f32.mrb[0].mxu0
      %1984 = vmatprep.mubr.bf16.mxu0 %v637
      %1985 = vmatmul.mubr.bf16.gmra.mrb[0].mxu0 %v500
      %v1986 = vpop.f32.mrb[0].mxu0
      %v1987 = vadd.f32 0.0, %v1986
      %v1988 = vpop.f32.mrb[0].mxu0
      %v1989 = vpop.f32.mrb[0].mxu0
      %v1990 = vadd.f32 0.0, %v1989
      %v1991 = vpop.f32.mrb[0].mxu0
      %1992 = vmatprep.mubr.bf16.mxu0 %v640
      %1993 = vmatmul.mubr.bf16.gmra.mrb[0].mxu0 %v502
      %v1994 = vpop.f32.mrb[0].mxu0
      %v1995 = vadd.f32 0.0, %v1994
      %v1996 = vpop.f32.mrb[0].mxu0
      %v1997 = vpop.f32.mrb[0].mxu0
      %v1998 = vadd.f32 0.0, %v1997
      %v1999 = vpop.f32.mrb[0].mxu0
      %2000 = vmatprep.mubr.bf16.mxu0 %v643
      %2001 = vmatmul.mubr.bf16.gmra.mrb[0].mxu0 %v504
      %v2002 = vpop.f32.mrb[0].mxu0
      %v2003 = vadd.f32 0.0, %v2002
      %v2004 = vpop.f32.mrb[0].mxu0
      %v2005 = vpop.f32.mrb[0].mxu0
      %v2006 = vadd.f32 0.0, %v2005
      %v2007 = vpop.f32.mrb[0].mxu0
      %2008 = vmatprep.mubr.bf16.mxu0 %v646
      %2009 = vmatmul.mubr.bf16.gmra.mrb[0].mxu0 %v506
      %v2010 = vpop.f32.mrb[0].mxu0
      %v2011 = vadd.f32 0.0, %v2010
      %v2012 = vpop.f32.mrb[0].mxu0
      %v2013 = vpop.f32.mrb[0].mxu0
      %v2014 = vadd.f32 0.0, %v2013
      %v2015 = vpop.f32.mrb[0].mxu0
      %2016 = vdwg.mxu0
      %v2017 = vmul.f32 %v1891, %v291
      %v2018 = vmul.f32 %v1894, %v292
      %v2019 = vmul.f32 %v1899, %v293
      %v2020 = vmul.f32 %v1902, %v294
      %v2021 = vmul.f32 %v1907, %v295
      %v2022 = vmul.f32 %v1910, %v296
      %v2023 = vmul.f32 %v1915, %v297
      %v2024 = vmul.f32 %v1918, %v298
      %v2025 = vmul.f32 %v1923, %v299
      %v2026 = vmul.f32 %v1926, %v300
      %v2027 = vmul.f32 %v1931, %v301
      %v2028 = vmul.f32 %v1934, %v302
      %v2029 = vmul.f32 %v1939, %v303
      %v2030 = vmul.f32 %v1942, %v304
      %v2031 = vmul.f32 %v1947, %v305
      %v2032 = vmul.f32 %v1950, %v306
      %v2033 = vmul.f32 %v1955, %v307
      %v2034 = vmul.f32 %v1958, %v308
      %v2035 = vmul.f32 %v1963, %v309
      %v2036 = vmul.f32 %v1966, %v310
      %v2037 = vmul.f32 %v1971, %v311
      %v2038 = vmul.f32 %v1974, %v312
      %v2039 = vmul.f32 %v1979, %v313
      %v2040 = vmul.f32 %v1982, %v314
      %v2041 = vmul.f32 %v1987, %v315
      %v2042 = vmul.f32 %v1990, %v316
      %v2043 = vmul.f32 %v1995, %v317
      %v2044 = vmul.f32 %v1998, %v318
      %v2045 = vmul.f32 %v2003, %v319
      %v2046 = vmul.f32 %v2006, %v320
      %v2047 = vmul.f32 %v2011, %v321
      %v2048 = vmul.f32 %v2014, %v322
      %v2049 = vmul.f32 %v1955, %v323
      %v2050 = vmul.f32 %v1958, %v324
      %v2051 = vmul.f32 %v1963, %v325
      %v2052 = vmul.f32 %v1966, %v326
      %v2053 = vmul.f32 %v1971, %v327
      %v2054 = vmul.f32 %v1974, %v328
      %v2055 = vmul.f32 %v1979, %v329
      %v2056 = vmul.f32 %v1982, %v330
      %v2057 = vmul.f32 %v1987, %v331
      %v2058 = vmul.f32 %v1990, %v332
      %v2059 = vmul.f32 %v1995, %v333
      %v2060 = vmul.f32 %v1998, %v334
      %v2061 = vmul.f32 %v2003, %v335
      %v2062 = vmul.f32 %v2006, %v336
      %v2063 = vmul.f32 %v2011, %v337
      %v2064 = vmul.f32 %v2014, %v338
      %v2065 = vmul.f32 %v1891, %v339
      %v2066 = vmul.f32 %v1894, %v340
      %v2067 = vmul.f32 %v1899, %v341
      %v2068 = vmul.f32 %v1902, %v342
      %v2069 = vmul.f32 %v1907, %v343
      %v2070 = vmul.f32 %v1910, %v344
      %v2071 = vmul.f32 %v1915, %v345
      %v2072 = vmul.f32 %v1918, %v346
      %v2073 = vmul.f32 %v1923, %v347
      %v2074 = vmul.f32 %v1926, %v348
      %v2075 = vmul.f32 %v1931, %v349
      %v2076 = vmul.f32 %v1934, %v350
      %v2077 = vmul.f32 %v1939, %v351
      %v2078 = vmul.f32 %v1942, %v352
      %v2079 = vmul.f32 %v1947, %v353
      %v2080 = vmul.f32 %v1950, %v354
      %v2081 = vadd.f32 %v2017, %v2049
      %v2082 = vadd.f32 %v2018, %v2050
      %v2083 = vadd.f32 %v2019, %v2051
      %v2084 = vadd.f32 %v2020, %v2052
      %v2085 = vadd.f32 %v2021, %v2053
      %v2086 = vadd.f32 %v2022, %v2054
      %v2087 = vadd.f32 %v2023, %v2055
      %v2088 = vadd.f32 %v2024, %v2056
      %v2089 = vadd.f32 %v2025, %v2057
      %v2090 = vadd.f32 %v2026, %v2058
      %v2091 = vadd.f32 %v2027, %v2059
      %v2092 = vadd.f32 %v2028, %v2060
      %v2093 = vadd.f32 %v2029, %v2061
      %v2094 = vadd.f32 %v2030, %v2062
      %v2095 = vadd.f32 %v2031, %v2063
      %v2096 = vadd.f32 %v2032, %v2064
      %v2097 = vadd.f32 %v2033, %v2065
      %v2098 = vadd.f32 %v2034, %v2066
      %v2099 = vadd.f32 %v2035, %v2067
      %v2100 = vadd.f32 %v2036, %v2068
      %v2101 = vadd.f32 %v2037, %v2069
      %v2102 = vadd.f32 %v2038, %v2070
      %v2103 = vadd.f32 %v2039, %v2071
      %v2104 = vadd.f32 %v2040, %v2072
      %v2105 = vadd.f32 %v2041, %v2073
      %v2106 = vadd.f32 %v2042, %v2074
      %v2107 = vadd.f32 %v2043, %v2075
      %v2108 = vadd.f32 %v2044, %v2076
      %v2109 = vadd.f32 %v2045, %v2077
      %v2110 = vadd.f32 %v2046, %v2078
      %v2111 = vadd.f32 %v2047, %v2079
      %v2112 = vadd.f32 %v2048, %v2080
      %v2113 = vpack.c.bf16 %v2082, %v2081
      %v2114 = vpack.c.bf16 %v2084, %v2083
      %v2115 = vpack.c.bf16 %v2086, %v2085
      %v2116 = vpack.c.bf16 %v2088, %v2087
      %v2117 = vpack.c.bf16 %v2090, %v2089
      %v2118 = vpack.c.bf16 %v2092, %v2091
      %v2119 = vpack.c.bf16 %v2094, %v2093
      %v2120 = vpack.c.bf16 %v2096, %v2095
      %v2121 = vpack.c.bf16 %v2098, %v2097
      %v2122 = vpack.c.bf16 %v2100, %v2099
      %v2123 = vpack.c.bf16 %v2102, %v2101
      %v2124 = vpack.c.bf16 %v2104, %v2103
      %v2125 = vpack.c.bf16 %v2106, %v2105
      %v2126 = vpack.c.bf16 %v2108, %v2107
      %v2127 = vpack.c.bf16 %v2110, %v2109
      %v2128 = vpack.c.bf16 %v2112, %v2111
      %2129 = vmatprep.subr.bf16.mxu0 0
      %2130 = vmatpush1.bf16.msra.mxu0 %v2113
      %2131 = vmatprep.subr.bf16.mxu0 0
      %2132 = vmatpush1.bf16.msra.mxu0 %v2114
      %2133 = vmatprep.subr.bf16.mxu0 0
      %2134 = vmatpush1.bf16.msra.mxu0 %v2115
      %2135 = vmatprep.subr.bf16.mxu0 0
      %2136 = vmatpush1.bf16.msra.mxu0 %v2116
      %2137 = vmatprep.subr.bf16.mxu0 0
      %2138 = vmatpush1.bf16.msra.mxu0 %v2117
      %2139 = vmatprep.subr.bf16.mxu0 0
      %2140 = vmatpush1.bf16.msra.mxu0 %v2118
      %2141 = vmatprep.subr.bf16.mxu0 0
      %2142 = vmatpush1.bf16.msra.mxu0 %v2119
      %2143 = vmatprep.subr.bf16.mxu0 0
      %2144 = vmatpush1.bf16.msra.mxu0 %v2120
      %2145 = vmatprep.subr.bf16.mxu0 0
      %2146 = vmatpush1.bf16.msra.mxu0 %v2121
      %2147 = vmatprep.subr.bf16.mxu0 0
      %2148 = vmatpush1.bf16.msra.mxu0 %v2122
      %2149 = vmatprep.subr.bf16.mxu0 0
      %2150 = vmatpush1.bf16.msra.mxu0 %v2123
      %2151 = vmatprep.subr.bf16.mxu0 0
      %2152 = vmatpush1.bf16.msra.mxu0 %v2124
      %2153 = vmatprep.subr.bf16.mxu0 0
      %2154 = vmatpush1.bf16.msra.mxu0 %v2125
      %2155 = vmatprep.subr.bf16.mxu0 0
      %2156 = vmatpush1.bf16.msra.mxu0 %v2126
      %2157 = vmatprep.subr.bf16.mxu0 0
      %2158 = vmatpush1.bf16.msra.mxu0 %v2127
      %2159 = vmatprep.subr.bf16.mxu0 0
      %2160 = vmatpush1.bf16.msra.mxu0 %v2128
      %2161 = vmatprep.mubr.bf16.mxu0 %v1001
      %2162 = vmatmul.mubr.bf16.gmra.mrb[0].mxu0 %v1000
      %v2163 = vpop.f32.mrb[0].mxu0
      %v2164 = vadd.f32 0.0, %v2163
      %v2165 = vpop.f32.mrb[0].mxu0
      %v2166 = vpop.f32.mrb[0].mxu0
      %v2167 = vadd.f32 0.0, %v2166
      %v2168 = vpop.f32.mrb[0].mxu0
      %2169 = vmatprep.mubr.bf16.mxu0 %v1003
      %2170 = vmatmul.mubr.bf16.gmra.mrb[0].mxu0 %v1002
      %v2171 = vpop.f32.mrb[0].mxu0
      %v2172 = vadd.f32 0.0, %v2171
      %v2173 = vpop.f32.mrb[0].mxu0
      %v2174 = vpop.f32.mrb[0].mxu0
      %v2175 = vadd.f32 0.0, %v2174
      %v2176 = vpop.f32.mrb[0].mxu0
      %2177 = vmatprep.mubr.bf16.mxu0 %v1005
      %2178 = vmatmul.mubr.bf16.gmra.mrb[0].mxu0 %v1004
      %v2179 = vpop.f32.mrb[0].mxu0
      %v2180 = vadd.f32 0.0, %v2179
      %v2181 = vpop.f32.mrb[0].mxu0
      %v2182 = vpop.f32.mrb[0].mxu0
      %v2183 = vadd.f32 0.0, %v2182
      %v2184 = vpop.f32.mrb[0].mxu0
      %2185 = vmatprep.mubr.bf16.mxu0 %v1007
      %2186 = vmatmul.mubr.bf16.gmra.mrb[0].mxu0 %v1006
      %v2187 = vpop.f32.mrb[0].mxu0
      %v2188 = vadd.f32 0.0, %v2187
      %v2189 = vpop.f32.mrb[0].mxu0
      %v2190 = vpop.f32.mrb[0].mxu0
      %v2191 = vadd.f32 0.0, %v2190
      %v2192 = vpop.f32.mrb[0].mxu0
      %2193 = vmatprep.mubr.bf16.mxu0 %v1009
      %2194 = vmatmul.mubr.bf16.gmra.mrb[0].mxu0 %v1008
      %v2195 = vpop.f32.mrb[0].mxu0
      %v2196 = vadd.f32 0.0, %v2195
      %v2197 = vpop.f32.mrb[0].mxu0
      %v2198 = vpop.f32.mrb[0].mxu0
      %v2199 = vadd.f32 0.0, %v2198
      %v2200 = vpop.f32.mrb[0].mxu0
      %2201 = vmatprep.mubr.bf16.mxu0 %v1011
      %2202 = vmatmul.mubr.bf16.gmra.mrb[0].mxu0 %v1010
      %v2203 = vpop.f32.mrb[0].mxu0
      %v2204 = vadd.f32 0.0, %v2203
      %v2205 = vpop.f32.mrb[0].mxu0
      %v2206 = vpop.f32.mrb[0].mxu0
      %v2207 = vadd.f32 0.0, %v2206
      %v2208 = vpop.f32.mrb[0].mxu0
      %2209 = vmatprep.mubr.bf16.mxu0 %v1013
      %2210 = vmatmul.mubr.bf16.gmra.mrb[0].mxu0 %v1012
      %v2211 = vpop.f32.mrb[0].mxu0
      %v2212 = vadd.f32 0.0, %v2211
      %v2213 = vpop.f32.mrb[0].mxu0
      %v2214 = vpop.f32.mrb[0].mxu0
      %v2215 = vadd.f32 0.0, %v2214
      %v2216 = vpop.f32.mrb[0].mxu0
      %2217 = vmatprep.mubr.bf16.mxu0 %v1015
      %2218 = vmatmul.mubr.bf16.gmra.mrb[0].mxu0 %v1014
      %v2219 = vpop.f32.mrb[0].mxu0
      %v2220 = vadd.f32 0.0, %v2219
      %v2221 = vpop.f32.mrb[0].mxu0
      %v2222 = vpop.f32.mrb[0].mxu0
      %v2223 = vadd.f32 0.0, %v2222
      %v2224 = vpop.f32.mrb[0].mxu0
      %2225 = vmatprep.mubr.bf16.mxu0 %v1017
      %2226 = vmatmul.mubr.bf16.gmra.mrb[0].mxu0 %v1016
      %v2227 = vpop.f32.mrb[0].mxu0
      %v2228 = vadd.f32 0.0, %v2227
      %v2229 = vpop.f32.mrb[0].mxu0
      %v2230 = vpop.f32.mrb[0].mxu0
      %v2231 = vadd.f32 0.0, %v2230
      %v2232 = vpop.f32.mrb[0].mxu0
      %2233 = vmatprep.mubr.bf16.mxu0 %v1019
      %2234 = vmatmul.mubr.bf16.gmra.mrb[0].mxu0 %v1018
      %v2235 = vpop.f32.mrb[0].mxu0
      %v2236 = vadd.f32 0.0, %v2235
      %v2237 = vpop.f32.mrb[0].mxu0
      %v2238 = vpop.f32.mrb[0].mxu0
      %v2239 = vadd.f32 0.0, %v2238
      %v2240 = vpop.f32.mrb[0].mxu0
      %2241 = vmatprep.mubr.bf16.mxu0 %v1021
      %2242 = vmatmul.mubr.bf16.gmra.mrb[0].mxu0 %v1020
      %v2243 = vpop.f32.mrb[0].mxu0
      %v2244 = vadd.f32 0.0, %v2243
      %v2245 = vpop.f32.mrb[0].mxu0
      %v2246 = vpop.f32.mrb[0].mxu0
      %v2247 = vadd.f32 0.0, %v2246
      %v2248 = vpop.f32.mrb[0].mxu0
      %2249 = vmatprep.mubr.bf16.mxu0 %v1023
      %2250 = vmatmul.mubr.bf16.gmra.mrb[0].mxu0 %v1022
      %v2251 = vpop.f32.mrb[0].mxu0
      %v2252 = vadd.f32 0.0, %v2251
      %v2253 = vpop.f32.mrb[0].mxu0
      %v2254 = vpop.f32.mrb[0].mxu0
      %v2255 = vadd.f32 0.0, %v2254
      %v2256 = vpop.f32.mrb[0].mxu0
      %2257 = vmatprep.mubr.bf16.mxu0 %v1025
      %2258 = vmatmul.mubr.bf16.gmra.mrb[0].mxu0 %v1024
      %v2259 = vpop.f32.mrb[0].mxu0
      %v2260 = vadd.f32 0.0, %v2259
      %v2261 = vpop.f32.mrb[0].mxu0
      %v2262 = vpop.f32.mrb[0].mxu0
      %v2263 = vpop.f32.mrb[0].mxu0
      %2264 = vdwg.mxu0
      %s2265 = scalar_lea.vmem %s231, 400
      %2266 = vst [vmem:[%s2265] sm:$0xff] %v2164
      %2267 = vst [vmem:[%s2265 + $0x8] sm:$0xff] %v2167
      %2268 = vst [vmem:[%s2265 + $0x10] sm:$0xff] %v2172
      %2269 = vst [vmem:[%s2265 + $0x18] sm:$0xff] %v2175
      %2270 = vst [vmem:[%s2265 + $0x20] sm:$0xff] %v2180
      %2271 = vst [vmem:[%s2265 + $0x28] sm:$0xff] %v2183
      %2272 = vst [vmem:[%s2265 + $0x30] sm:$0xff] %v2188
      %2273 = vst [vmem:[%s2265 + $0x38] sm:$0xff] %v2191
      %2274 = vst [vmem:[%s2265 + $0x40] sm:$0xff] %v2196
      %2275 = vst [vmem:[%s2265 + $0x48] sm:$0xff] %v2199
      %2276 = vst [vmem:[%s2265 + $0x50] sm:$0xff] %v2204
      %2277 = vst [vmem:[%s2265 + $0x58] sm:$0xff] %v2207
      %2278 = vst [vmem:[%s2265 + $0x60] sm:$0xff] %v2212
      %2279 = vst [vmem:[%s2265 + $0x68] sm:$0xff] %v2215
      %2280 = vst [vmem:[%s2265 + $0x70] sm:$0xff] %v2220
      %2281 = vst [vmem:[%s2265 + $0x78] sm:$0xff] %v2223
      %2282 = vst [vmem:[%s2265 + $0x80] sm:$0xff] %v2228
      %2283 = vst [vmem:[%s2265 + $0x88] sm:$0xff] %v2231
      %2284 = vst [vmem:[%s2265 + $0x90] sm:$0xff] %v2236
      %2285 = vst [vmem:[%s2265 + $0x98] sm:$0xff] %v2239
      %2286 = vst [vmem:[%s2265 + $0xa0] sm:$0xff] %v2244
      %2287 = vst [vmem:[%s2265 + $0xa8] sm:$0xff] %v2247
      %2288 = vst [vmem:[%s2265 + $0xb0] sm:$0xff] %v2252
      %2289 = vst [vmem:[%s2265 + $0xb8] sm:$0xff] %v2255
      %2290 = vst [vmem:[%s2265 + $0xc0] sm:$0xf] %v2260
      %s2291 = scalar_lea.vmem %s224, 300
      %v2292 = vld [vmem:[%s2291] sm:$0xf]
      %v2293 = vld [vmem:[%s2291 + $0x4] sm:$0xf]
      %v2294 = vld [vmem:[%s2291 + $0x8] sm:$0xf]
      %v2295 = vld [vmem:[%s2291 + $0xc] sm:$0xf]
      %v2296 = vld [vmem:[%s2291 + $0x10] sm:$0xf]
      %v2297 = vld [vmem:[%s2291 + $0x14] sm:$0xf]
      %v2298 = vld [vmem:[%s2291 + $0x18] sm:$0xf]
      %v2299 = vld [vmem:[%s2291 + $0x1c] sm:$0xf]
      %v2300 = vld [vmem:[%s2291 + $0x20] sm:$0xf]
      %v2301 = vld [vmem:[%s2291 + $0x24] sm:$0xf]
      %v2302 = vld [vmem:[%s2291 + $0x28] sm:$0xf]
      %v2303 = vld [vmem:[%s2291 + $0x2c] sm:$0xf]
      %v2304 = vld [vmem:[%s2291 + $0x30] sm:$0xf]
      %v2305 = vld [vmem:[%s2291 + $0x34] sm:$0xf]
      %v2306 = vld [vmem:[%s2291 + $0x38] sm:$0xf]
      %v2307 = vld [vmem:[%s2291 + $0x3c] sm:$0xf]
      %v2308 = vld [vmem:[%s2291 + $0x40] sm:$0xf]
      %v2309 = vld [vmem:[%s2291 + $0x44] sm:$0xf]
      %v2310 = vld [vmem:[%s2291 + $0x48] sm:$0xf]
      %v2311 = vld [vmem:[%s2291 + $0x4c] sm:$0xf]
      %v2312 = vld [vmem:[%s2291 + $0x50] sm:$0xf]
      %v2313 = vld [vmem:[%s2291 + $0x54] sm:$0xf]
      %v2314 = vld [vmem:[%s2291 + $0x58] sm:$0xf]
      %v2315 = vld [vmem:[%s2291 + $0x5c] sm:$0xf]
      %v2316 = vld [vmem:[%s2291 + $0x60] sm:$0x3]
      %v2342 = vunpack.c.l.b16 %v2292
      %v2343 = vunpack.c.l.b16 %v2293
      %v2344 = vunpack.c.l.b16 %v2294
      %v2345 = vunpack.c.l.b16 %v2295
      %v2346 = vunpack.c.l.b16 %v2296
      %v2347 = vunpack.c.l.b16 %v2297
      %v2348 = vunpack.c.l.b16 %v2298
      %v2349 = vunpack.c.l.b16 %v2299
      %v2350 = vunpack.c.l.b16 %v2300
      %v2351 = vunpack.c.l.b16 %v2301
      %v2352 = vunpack.c.l.b16 %v2302
      %v2353 = vunpack.c.l.b16 %v2303
      %v2354 = vunpack.c.l.b16 %v2304
      %v2355 = vunpack.c.l.b16 %v2305
      %v2356 = vunpack.c.l.b16 %v2306
      %v2357 = vunpack.c.l.b16 %v2307
      %v2358 = vunpack.c.l.b16 %v2308
      %v2359 = vunpack.c.l.b16 %v2309
      %v2360 = vunpack.c.l.b16 %v2310
      %v2361 = vunpack.c.l.b16 %v2311
      %v2362 = vunpack.c.l.b16 %v2312
      %v2363 = vunpack.c.l.b16 %v2313
      %v2364 = vunpack.c.l.b16 %v2314
      %v2365 = vunpack.c.l.b16 %v2315
      %v2366 = vunpack.c.l.b16 %v2316
      %v2367 = vpack.c.b16 %v2343, %v2342
      %v2368 = vpack.c.b16 %v2345, %v2344
      %v2369 = vpack.c.b16 %v2347, %v2346
      %v2370 = vpack.c.b16 %v2349, %v2348
      %v2371 = vpack.c.b16 %v2351, %v2350
      %v2372 = vpack.c.b16 %v2353, %v2352
      %v2373 = vpack.c.b16 %v2355, %v2354
      %v2374 = vpack.c.b16 %v2357, %v2356
      %v2375 = vpack.c.b16 %v2359, %v2358
      %v2376 = vpack.c.b16 %v2361, %v2360
      %v2377 = vpack.c.b16 %v2363, %v2362
      %v2378 = vpack.c.b16 %v2365, %v2364
      %v2379 = vpack.c.b16 %v2366, %v2366
      %v2393 = vsel %vm648, %v2379, 0
      %2395 = vmatprep.subr.bf16.mxu0 0
      %2396 = vmatpush1.bf16.msra.mxu0 %v2367
      %2397 = vmatprep.subr.bf16.mxu0 0
      %2398 = vmatpush1.bf16.msra.mxu0 %v2368
      %2399 = vmatprep.subr.bf16.mxu0 0
      %2400 = vmatpush1.bf16.msra.mxu0 %v2369
      %2401 = vmatprep.subr.bf16.mxu0 0
      %2402 = vmatpush1.bf16.msra.mxu0 %v2370
      %2403 = vmatprep.subr.bf16.mxu0 0
      %2404 = vmatpush1.bf16.msra.mxu0 %v2371
      %2405 = vmatprep.subr.bf16.mxu0 0
      %2406 = vmatpush1.bf16.msra.mxu0 %v2372
      %2407 = vmatprep.subr.bf16.mxu0 0
      %2408 = vmatpush1.bf16.msra.mxu0 %v2373
      %2409 = vmatprep.subr.bf16.mxu0 0
      %2410 = vmatpush1.bf16.msra.mxu0 %v2374
      %2411 = vmatprep.subr.bf16.mxu0 0
      %2412 = vmatpush1.bf16.msra.mxu0 %v2375
      %2413 = vmatprep.subr.bf16.mxu0 0
      %2414 = vmatpush1.bf16.msra.mxu0 %v2376
      %2415 = vmatprep.subr.bf16.mxu0 0
      %2416 = vmatpush1.bf16.msra.mxu0 %v2377
      %2417 = vmatprep.subr.bf16.mxu0 0
      %2418 = vmatpush1.bf16.msra.mxu0 %v2378
      %2419 = vmatprep.subr.bf16.mxu0 0
      %2420 = vmatpush1.bf16.msra.mxu0 %v2393
      %2421 = vmatprep.subr.bf16.mxu0 0
      %2422 = vmatpush1.bf16.msra.mxu0 0
      %2423 = vmatprep.subr.bf16.mxu0 0
      %2424 = vmatpush1.bf16.msra.mxu0 0
      %2425 = vmatprep.subr.bf16.mxu0 0
      %2426 = vmatpush1.bf16.msra.mxu0 0
      %2427 = vmatprep.mubr.bf16.mxu0 %v601
      %2428 = vmatmul.mubr.bf16.gmra.mrb[0].mxu0 %v476
      %v2429 = vpop.f32.mrb[0].mxu0
      %v2430 = vadd.f32 0.0, %v2429
      %v2431 = vpop.f32.mrb[0].mxu0
      %v2432 = vpop.f32.mrb[0].mxu0
      %v2433 = vadd.f32 0.0, %v2432
      %v2434 = vpop.f32.mrb[0].mxu0
      %2435 = vmatprep.mubr.bf16.mxu0 %v604
      %2436 = vmatmul.mubr.bf16.gmra.mrb[0].mxu0 %v478
      %v2437 = vpop.f32.mrb[0].mxu0
      %v2438 = vadd.f32 0.0, %v2437
      %v2439 = vpop.f32.mrb[0].mxu0
      %v2440 = vpop.f32.mrb[0].mxu0
      %v2441 = vadd.f32 0.0, %v2440
      %v2442 = vpop.f32.mrb[0].mxu0
      %2443 = vmatprep.mubr.bf16.mxu0 %v607
      %2444 = vmatmul.mubr.bf16.gmra.mrb[0].mxu0 %v480
      %v2445 = vpop.f32.mrb[0].mxu0
      %v2446 = vadd.f32 0.0, %v2445
      %v2447 = vpop.f32.mrb[0].mxu0
      %v2448 = vpop.f32.mrb[0].mxu0
      %v2449 = vadd.f32 0.0, %v2448
      %v2450 = vpop.f32.mrb[0].mxu0
      %2451 = vmatprep.mubr.bf16.mxu0 %v610
      %2452 = vmatmul.mubr.bf16.gmra.mrb[0].mxu0 %v482
      %v2453 = vpop.f32.mrb[0].mxu0
      %v2454 = vadd.f32 0.0, %v2453
      %v2455 = vpop.f32.mrb[0].mxu0
      %v2456 = vpop.f32.mrb[0].mxu0
      %v2457 = vadd.f32 0.0, %v2456
      %v2458 = vpop.f32.mrb[0].mxu0
      %2459 = vmatprep.mubr.bf16.mxu0 %v613
      %2460 = vmatmul.mubr.bf16.gmra.mrb[0].mxu0 %v484
      %v2461 = vpop.f32.mrb[0].mxu0
      %v2462 = vadd.f32 0.0, %v2461
      %v2463 = vpop.f32.mrb[0].mxu0
      %v2464 = vpop.f32.mrb[0].mxu0
      %v2465 = vadd.f32 0.0, %v2464
      %v2466 = vpop.f32.mrb[0].mxu0
      %2467 = vmatprep.mubr.bf16.mxu0 %v616
      %2468 = vmatmul.mubr.bf16.gmra.mrb[0].mxu0 %v486
      %v2469 = vpop.f32.mrb[0].mxu0
      %v2470 = vadd.f32 0.0, %v2469
      %v2471 = vpop.f32.mrb[0].mxu0
      %v2472 = vpop.f32.mrb[0].mxu0
      %v2473 = vadd.f32 0.0, %v2472
      %v2474 = vpop.f32.mrb[0].mxu0
      %2475 = vmatprep.mubr.bf16.mxu0 %v619
      %2476 = vmatmul.mubr.bf16.gmra.mrb[0].mxu0 %v488
      %v2477 = vpop.f32.mrb[0].mxu0
      %v2478 = vadd.f32 0.0, %v2477
      %v2479 = vpop.f32.mrb[0].mxu0
      %v2480 = vpop.f32.mrb[0].mxu0
      %v2481 = vadd.f32 0.0, %v2480
      %v2482 = vpop.f32.mrb[0].mxu0
      %2483 = vmatprep.mubr.bf16.mxu0 %v622
      %2484 = vmatmul.mubr.bf16.gmra.mrb[0].mxu0 %v490
      %v2485 = vpop.f32.mrb[0].mxu0
      %v2486 = vadd.f32 0.0, %v2485
      %v2487 = vpop.f32.mrb[0].mxu0
      %v2488 = vpop.f32.mrb[0].mxu0
      %v2489 = vadd.f32 0.0, %v2488
      %v2490 = vpop.f32.mrb[0].mxu0
      %2491 = vmatprep.mubr.bf16.mxu0 %v625
      %2492 = vmatmul.mubr.bf16.gmra.mrb[0].mxu0 %v492
      %v2493 = vpop.f32.mrb[0].mxu0
      %v2494 = vadd.f32 0.0, %v2493
      %v2495 = vpop.f32.mrb[0].mxu0
      %v2496 = vpop.f32.mrb[0].mxu0
      %v2497 = vadd.f32 0.0, %v2496
      %v2498 = vpop.f32.mrb[0].mxu0
      %2499 = vmatprep.mubr.bf16.mxu0 %v628
      %2500 = vmatmul.mubr.bf16.gmra.mrb[0].mxu0 %v494
      %v2501 = vpop.f32.mrb[0].mxu0
      %v2502 = vadd.f32 0.0, %v2501
      %v2503 = vpop.f32.mrb[0].mxu0
      %v2504 = vpop.f32.mrb[0].mxu0
      %v2505 = vadd.f32 0.0, %v2504
      %v2506 = vpop.f32.mrb[0].mxu0
      %2507 = vmatprep.mubr.bf16.mxu0 %v631
      %2508 = vmatmul.mubr.bf16.gmra.mrb[0].mxu0 %v496
      %v2509 = vpop.f32.mrb[0].mxu0
      %v2510 = vadd.f32 0.0, %v2509
      %v2511 = vpop.f32.mrb[0].mxu0
      %v2512 = vpop.f32.mrb[0].mxu0
      %v2513 = vadd.f32 0.0, %v2512
      %v2514 = vpop.f32.mrb[0].mxu0
      %2515 = vmatprep.mubr.bf16.mxu0 %v634
      %2516 = vmatmul.mubr.bf16.gmra.mrb[0].mxu0 %v498
      %v2517 = vpop.f32.mrb[0].mxu0
      %v2518 = vadd.f32 0.0, %v2517
      %v2519 = vpop.f32.mrb[0].mxu0
      %v2520 = vpop.f32.mrb[0].mxu0
      %v2521 = vadd.f32 0.0, %v2520
      %v2522 = vpop.f32.mrb[0].mxu0
      %2523 = vmatprep.mubr.bf16.mxu0 %v637
      %2524 = vmatmul.mubr.bf16.gmra.mrb[0].mxu0 %v500
      %v2525 = vpop.f32.mrb[0].mxu0
      %v2526 = vadd.f32 0.0, %v2525
      %v2527 = vpop.f32.mrb[0].mxu0
      %v2528 = vpop.f32.mrb[0].mxu0
      %v2529 = vadd.f32 0.0, %v2528
      %v2530 = vpop.f32.mrb[0].mxu0
      %2531 = vmatprep.mubr.bf16.mxu0 %v640
      %2532 = vmatmul.mubr.bf16.gmra.mrb[0].mxu0 %v502
      %v2533 = vpop.f32.mrb[0].mxu0
      %v2534 = vadd.f32 0.0, %v2533
      %v2535 = vpop.f32.mrb[0].mxu0
      %v2536 = vpop.f32.mrb[0].mxu0
      %v2537 = vadd.f32 0.0, %v2536
      %v2538 = vpop.f32.mrb[0].mxu0
      %2539 = vmatprep.mubr.bf16.mxu0 %v643
      %2540 = vmatmul.mubr.bf16.gmra.mrb[0].mxu0 %v504
      %v2541 = vpop.f32.mrb[0].mxu0
      %v2542 = vadd.f32 0.0, %v2541
      %v2543 = vpop.f32.mrb[0].mxu0
      %v2544 = vpop.f32.mrb[0].mxu0
      %v2545 = vadd.f32 0.0, %v2544
      %v2546 = vpop.f32.mrb[0].mxu0
      %2547 = vmatprep.mubr.bf16.mxu0 %v646
      %2548 = vmatmul.mubr.bf16.gmra.mrb[0].mxu0 %v506
      %v2549 = vpop.f32.mrb[0].mxu0
      %v2550 = vadd.f32 0.0, %v2549
      %v2551 = vpop.f32.mrb[0].mxu0
      %v2552 = vpop.f32.mrb[0].mxu0
      %v2553 = vadd.f32 0.0, %v2552
      %v2554 = vpop.f32.mrb[0].mxu0
      %2555 = vdwg.mxu0
      %v2556 = vmul.f32 %v2430, %v291
      %v2557 = vmul.f32 %v2433, %v292
      %v2558 = vmul.f32 %v2438, %v293
      %v2559 = vmul.f32 %v2441, %v294
      %v2560 = vmul.f32 %v2446, %v295
      %v2561 = vmul.f32 %v2449, %v296
      %v2562 = vmul.f32 %v2454, %v297
      %v2563 = vmul.f32 %v2457, %v298
      %v2564 = vmul.f32 %v2462, %v299
      %v2565 = vmul.f32 %v2465, %v300
      %v2566 = vmul.f32 %v2470, %v301
      %v2567 = vmul.f32 %v2473, %v302
      %v2568 = vmul.f32 %v2478, %v303
      %v2569 = vmul.f32 %v2481, %v304
      %v2570 = vmul.f32 %v2486, %v305
      %v2571 = vmul.f32 %v2489, %v306
      %v2572 = vmul.f32 %v2494, %v307
      %v2573 = vmul.f32 %v2497, %v308
      %v2574 = vmul.f32 %v2502, %v309
      %v2575 = vmul.f32 %v2505, %v310
      %v2576 = vmul.f32 %v2510, %v311
      %v2577 = vmul.f32 %v2513, %v312
      %v2578 = vmul.f32 %v2518, %v313
      %v2579 = vmul.f32 %v2521, %v314
      %v2580 = vmul.f32 %v2526, %v315
      %v2581 = vmul.f32 %v2529, %v316
      %v2582 = vmul.f32 %v2534, %v317
      %v2583 = vmul.f32 %v2537, %v318
      %v2584 = vmul.f32 %v2542, %v319
      %v2585 = vmul.f32 %v2545, %v320
      %v2586 = vmul.f32 %v2550, %v321
      %v2587 = vmul.f32 %v2553, %v322
      %v2588 = vmul.f32 %v2494, %v323
      %v2589 = vmul.f32 %v2497, %v324
      %v2590 = vmul.f32 %v2502, %v325
      %v2591 = vmul.f32 %v2505, %v326
      %v2592 = vmul.f32 %v2510, %v327
      %v2593 = vmul.f32 %v2513, %v328
      %v2594 = vmul.f32 %v2518, %v329
      %v2595 = vmul.f32 %v2521, %v330
      %v2596 = vmul.f32 %v2526, %v331
      %v2597 = vmul.f32 %v2529, %v332
      %v2598 = vmul.f32 %v2534, %v333
      %v2599 = vmul.f32 %v2537, %v334
      %v2600 = vmul.f32 %v2542, %v335
      %v2601 = vmul.f32 %v2545, %v336
      %v2602 = vmul.f32 %v2550, %v337
      %v2603 = vmul.f32 %v2553, %v338
      %v2604 = vmul.f32 %v2430, %v339
      %v2605 = vmul.f32 %v2433, %v340
      %v2606 = vmul.f32 %v2438, %v341
      %v2607 = vmul.f32 %v2441, %v342
      %v2608 = vmul.f32 %v2446, %v343
      %v2609 = vmul.f32 %v2449, %v344
      %v2610 = vmul.f32 %v2454, %v345
      %v2611 = vmul.f32 %v2457, %v346
      %v2612 = vmul.f32 %v2462, %v347
      %v2613 = vmul.f32 %v2465, %v348
      %v2614 = vmul.f32 %v2470, %v349
      %v2615 = vmul.f32 %v2473, %v350
      %v2616 = vmul.f32 %v2478, %v351
      %v2617 = vmul.f32 %v2481, %v352
      %v2618 = vmul.f32 %v2486, %v353
      %v2619 = vmul.f32 %v2489, %v354
      %v2620 = vadd.f32 %v2556, %v2588
      %v2621 = vadd.f32 %v2557, %v2589
      %v2622 = vadd.f32 %v2558, %v2590
      %v2623 = vadd.f32 %v2559, %v2591
      %v2624 = vadd.f32 %v2560, %v2592
      %v2625 = vadd.f32 %v2561, %v2593
      %v2626 = vadd.f32 %v2562, %v2594
      %v2627 = vadd.f32 %v2563, %v2595
      %v2628 = vadd.f32 %v2564, %v2596
      %v2629 = vadd.f32 %v2565, %v2597
      %v2630 = vadd.f32 %v2566, %v2598
      %v2631 = vadd.f32 %v2567, %v2599
      %v2632 = vadd.f32 %v2568, %v2600
      %v2633 = vadd.f32 %v2569, %v2601
      %v2634 = vadd.f32 %v2570, %v2602
      %v2635 = vadd.f32 %v2571, %v2603
      %v2636 = vadd.f32 %v2572, %v2604
      %v2637 = vadd.f32 %v2573, %v2605
      %v2638 = vadd.f32 %v2574, %v2606
      %v2639 = vadd.f32 %v2575, %v2607
      %v2640 = vadd.f32 %v2576, %v2608
      %v2641 = vadd.f32 %v2577, %v2609
      %v2642 = vadd.f32 %v2578, %v2610
      %v2643 = vadd.f32 %v2579, %v2611
      %v2644 = vadd.f32 %v2580, %v2612
      %v2645 = vadd.f32 %v2581, %v2613
      %v2646 = vadd.f32 %v2582, %v2614
      %v2647 = vadd.f32 %v2583, %v2615
      %v2648 = vadd.f32 %v2584, %v2616
      %v2649 = vadd.f32 %v2585, %v2617
      %v2650 = vadd.f32 %v2586, %v2618
      %v2651 = vadd.f32 %v2587, %v2619
      %v2652 = vpack.c.bf16 %v2621, %v2620
      %v2653 = vpack.c.bf16 %v2623, %v2622
      %v2654 = vpack.c.bf16 %v2625, %v2624
      %v2655 = vpack.c.bf16 %v2627, %v2626
      %v2656 = vpack.c.bf16 %v2629, %v2628
      %v2657 = vpack.c.bf16 %v2631, %v2630
      %v2658 = vpack.c.bf16 %v2633, %v2632
      %v2659 = vpack.c.bf16 %v2635, %v2634
      %v2660 = vpack.c.bf16 %v2637, %v2636
      %v2661 = vpack.c.bf16 %v2639, %v2638
      %v2662 = vpack.c.bf16 %v2641, %v2640
      %v2663 = vpack.c.bf16 %v2643, %v2642
      %v2664 = vpack.c.bf16 %v2645, %v2644
      %v2665 = vpack.c.bf16 %v2647, %v2646
      %v2666 = vpack.c.bf16 %v2649, %v2648
      %v2667 = vpack.c.bf16 %v2651, %v2650
      %2668 = vmatprep.subr.bf16.mxu0 0
      %2669 = vmatpush1.bf16.msra.mxu0 %v2652
      %2670 = vmatprep.subr.bf16.mxu0 0
      %2671 = vmatpush1.bf16.msra.mxu0 %v2653
      %2672 = vmatprep.subr.bf16.mxu0 0
      %2673 = vmatpush1.bf16.msra.mxu0 %v2654
      %2674 = vmatprep.subr.bf16.mxu0 0
      %2675 = vmatpush1.bf16.msra.mxu0 %v2655
      %2676 = vmatprep.subr.bf16.mxu0 0
      %2677 = vmatpush1.bf16.msra.mxu0 %v2656
      %2678 = vmatprep.subr.bf16.mxu0 0
      %2679 = vmatpush1.bf16.msra.mxu0 %v2657
      %2680 = vmatprep.subr.bf16.mxu0 0
      %2681 = vmatpush1.bf16.msra.mxu0 %v2658
      %2682 = vmatprep.subr.bf16.mxu0 0
      %2683 = vmatpush1.bf16.msra.mxu0 %v2659
      %2684 = vmatprep.subr.bf16.mxu0 0
      %2685 = vmatpush1.bf16.msra.mxu0 %v2660
      %2686 = vmatprep.subr.bf16.mxu0 0
      %2687 = vmatpush1.bf16.msra.mxu0 %v2661
      %2688 = vmatprep.subr.bf16.mxu0 0
      %2689 = vmatpush1.bf16.msra.mxu0 %v2662
      %2690 = vmatprep.subr.bf16.mxu0 0
      %2691 = vmatpush1.bf16.msra.mxu0 %v2663
      %2692 = vmatprep.subr.bf16.mxu0 0
      %2693 = vmatpush1.bf16.msra.mxu0 %v2664
      %2694 = vmatprep.subr.bf16.mxu0 0
      %2695 = vmatpush1.bf16.msra.mxu0 %v2665
      %2696 = vmatprep.subr.bf16.mxu0 0
      %2697 = vmatpush1.bf16.msra.mxu0 %v2666
      %2698 = vmatprep.subr.bf16.mxu0 0
      %2699 = vmatpush1.bf16.msra.mxu0 %v2667
      %2700 = vmatprep.mubr.bf16.mxu0 %v1001
      %2701 = vmatmul.mubr.bf16.gmra.mrb[0].mxu0 %v1000
      %v2702 = vpop.f32.mrb[0].mxu0
      %v2703 = vadd.f32 0.0, %v2702
      %v2704 = vpop.f32.mrb[0].mxu0
      %v2705 = vpop.f32.mrb[0].mxu0
      %v2706 = vadd.f32 0.0, %v2705
      %v2707 = vpop.f32.mrb[0].mxu0
      %2708 = vmatprep.mubr.bf16.mxu0 %v1003
      %2709 = vmatmul.mubr.bf16.gmra.mrb[0].mxu0 %v1002
      %v2710 = vpop.f32.mrb[0].mxu0
      %v2711 = vadd.f32 0.0, %v2710
      %v2712 = vpop.f32.mrb[0].mxu0
      %v2713 = vpop.f32.mrb[0].mxu0
      %v2714 = vadd.f32 0.0, %v2713
      %v2715 = vpop.f32.mrb[0].mxu0
      %2716 = vmatprep.mubr.bf16.mxu0 %v1005
      %2717 = vmatmul.mubr.bf16.gmra.mrb[0].mxu0 %v1004
      %v2718 = vpop.f32.mrb[0].mxu0
      %v2719 = vadd.f32 0.0, %v2718
      %v2720 = vpop.f32.mrb[0].mxu0
      %v2721 = vpop.f32.mrb[0].mxu0
      %v2722 = vadd.f32 0.0, %v2721
      %v2723 = vpop.f32.mrb[0].mxu0
      %2724 = vmatprep.mubr.bf16.mxu0 %v1007
      %2725 = vmatmul.mubr.bf16.gmra.mrb[0].mxu0 %v1006
      %v2726 = vpop.f32.mrb[0].mxu0
      %v2727 = vadd.f32 0.0, %v2726
      %v2728 = vpop.f32.mrb[0].mxu0
      %v2729 = vpop.f32.mrb[0].mxu0
      %v2730 = vadd.f32 0.0, %v2729
      %v2731 = vpop.f32.mrb[0].mxu0
      %2732 = vmatprep.mubr.bf16.mxu0 %v1009
      %2733 = vmatmul.mubr.bf16.gmra.mrb[0].mxu0 %v1008
      %v2734 = vpop.f32.mrb[0].mxu0
      %v2735 = vadd.f32 0.0, %v2734
      %v2736 = vpop.f32.mrb[0].mxu0
      %v2737 = vpop.f32.mrb[0].mxu0
      %v2738 = vadd.f32 0.0, %v2737
      %v2739 = vpop.f32.mrb[0].mxu0
      %2740 = vmatprep.mubr.bf16.mxu0 %v1011
      %2741 = vmatmul.mubr.bf16.gmra.mrb[0].mxu0 %v1010
      %v2742 = vpop.f32.mrb[0].mxu0
      %v2743 = vadd.f32 0.0, %v2742
      %v2744 = vpop.f32.mrb[0].mxu0
      %v2745 = vpop.f32.mrb[0].mxu0
      %v2746 = vadd.f32 0.0, %v2745
      %v2747 = vpop.f32.mrb[0].mxu0
      %2748 = vmatprep.mubr.bf16.mxu0 %v1013
      %2749 = vmatmul.mubr.bf16.gmra.mrb[0].mxu0 %v1012
      %v2750 = vpop.f32.mrb[0].mxu0
      %v2751 = vadd.f32 0.0, %v2750
      %v2752 = vpop.f32.mrb[0].mxu0
      %v2753 = vpop.f32.mrb[0].mxu0
      %v2754 = vadd.f32 0.0, %v2753
      %v2755 = vpop.f32.mrb[0].mxu0
      %2756 = vmatprep.mubr.bf16.mxu0 %v1015
      %2757 = vmatmul.mubr.bf16.gmra.mrb[0].mxu0 %v1014
      %v2758 = vpop.f32.mrb[0].mxu0
      %v2759 = vadd.f32 0.0, %v2758
      %v2760 = vpop.f32.mrb[0].mxu0
      %v2761 = vpop.f32.mrb[0].mxu0
      %v2762 = vadd.f32 0.0, %v2761
      %v2763 = vpop.f32.mrb[0].mxu0
      %2764 = vmatprep.mubr.bf16.mxu0 %v1017
      %2765 = vmatmul.mubr.bf16.gmra.mrb[0].mxu0 %v1016
      %v2766 = vpop.f32.mrb[0].mxu0
      %v2767 = vadd.f32 0.0, %v2766
      %v2768 = vpop.f32.mrb[0].mxu0
      %v2769 = vpop.f32.mrb[0].mxu0
      %v2770 = vadd.f32 0.0, %v2769
      %v2771 = vpop.f32.mrb[0].mxu0
      %2772 = vmatprep.mubr.bf16.mxu0 %v1019
      %2773 = vmatmul.mubr.bf16.gmra.mrb[0].mxu0 %v1018
      %v2774 = vpop.f32.mrb[0].mxu0
      %v2775 = vadd.f32 0.0, %v2774
      %v2776 = vpop.f32.mrb[0].mxu0
      %v2777 = vpop.f32.mrb[0].mxu0
      %v2778 = vadd.f32 0.0, %v2777
      %v2779 = vpop.f32.mrb[0].mxu0
      %2780 = vmatprep.mubr.bf16.mxu0 %v1021
      %2781 = vmatmul.mubr.bf16.gmra.mrb[0].mxu0 %v1020
      %v2782 = vpop.f32.mrb[0].mxu0
      %v2783 = vadd.f32 0.0, %v2782
      %v2784 = vpop.f32.mrb[0].mxu0
      %v2785 = vpop.f32.mrb[0].mxu0
      %v2786 = vadd.f32 0.0, %v2785
      %v2787 = vpop.f32.mrb[0].mxu0
      %2788 = vmatprep.mubr.bf16.mxu0 %v1023
      %2789 = vmatmul.mubr.bf16.gmra.mrb[0].mxu0 %v1022
      %v2790 = vpop.f32.mrb[0].mxu0
      %v2791 = vadd.f32 0.0, %v2790
      %v2792 = vpop.f32.mrb[0].mxu0
      %v2793 = vpop.f32.mrb[0].mxu0
      %v2794 = vadd.f32 0.0, %v2793
      %v2795 = vpop.f32.mrb[0].mxu0
      %2796 = vmatprep.mubr.bf16.mxu0 %v1025
      %2797 = vmatmul.mubr.bf16.gmra.mrb[0].mxu0 %v1024
      %v2798 = vpop.f32.mrb[0].mxu0
      %v2799 = vadd.f32 0.0, %v2798
      %v2800 = vpop.f32.mrb[0].mxu0
      %v2801 = vpop.f32.mrb[0].mxu0
      %v2802 = vpop.f32.mrb[0].mxu0
      %2803 = vdwg.mxu0
      %s2804 = scalar_lea.vmem %s231, 600
      %2805 = vst [vmem:[%s2804] sm:$0xff] %v2703
      %2806 = vst [vmem:[%s2804 + $0x8] sm:$0xff] %v2706
      %2807 = vst [vmem:[%s2804 + $0x10] sm:$0xff] %v2711
      %2808 = vst [vmem:[%s2804 + $0x18] sm:$0xff] %v2714
      %2809 = vst [vmem:[%s2804 + $0x20] sm:$0xff] %v2719
      %2810 = vst [vmem:[%s2804 + $0x28] sm:$0xff] %v2722
      %2811 = vst [vmem:[%s2804 + $0x30] sm:$0xff] %v2727
      %2812 = vst [vmem:[%s2804 + $0x38] sm:$0xff] %v2730
      %2813 = vst [vmem:[%s2804 + $0x40] sm:$0xff] %v2735
      %2814 = vst [vmem:[%s2804 + $0x48] sm:$0xff] %v2738
      %2815 = vst [vmem:[%s2804 + $0x50] sm:$0xff] %v2743
      %2816 = vst [vmem:[%s2804 + $0x58] sm:$0xff] %v2746
      %2817 = vst [vmem:[%s2804 + $0x60] sm:$0xff] %v2751
      %2818 = vst [vmem:[%s2804 + $0x68] sm:$0xff] %v2754
      %2819 = vst [vmem:[%s2804 + $0x70] sm:$0xff] %v2759
      %2820 = vst [vmem:[%s2804 + $0x78] sm:$0xff] %v2762
      %2821 = vst [vmem:[%s2804 + $0x80] sm:$0xff] %v2767
      %2822 = vst [vmem:[%s2804 + $0x88] sm:$0xff] %v2770
      %2823 = vst [vmem:[%s2804 + $0x90] sm:$0xff] %v2775
      %2824 = vst [vmem:[%s2804 + $0x98] sm:$0xff] %v2778
      %2825 = vst [vmem:[%s2804 + $0xa0] sm:$0xff] %v2783
      %2826 = vst [vmem:[%s2804 + $0xa8] sm:$0xff] %v2786
      %2827 = vst [vmem:[%s2804 + $0xb0] sm:$0xff] %v2791
      %2828 = vst [vmem:[%s2804 + $0xb8] sm:$0xff] %v2794
      %2829 = vst [vmem:[%s2804 + $0xc0] sm:$0xf] %v2799
      %s2830 = smul.u32 4, %s16
      %p2831 = scmp.lt.s32.totalorder %s2830, 7
      %s2832 = scalar_select %p2831, %s2830, 7
      %s2833 = smul.addr %s2832, 25
      %s2834 = smul.addr %s2833, 8
      %s2835 = scalar_lea.vmem %s5, %s2834
      // Predicated region
      $region41: #{global_filter_forward.1} parent=39 // pred_check
        %p2836 = pneg %p144
      $region42: #{global_filter_forward.1} parent=39 // pred_check_branch
        %2838 = sbr.rel (%p2836) target = $region44
      $region43: #{global_filter_forward.1} parent=39 // pred_region
        %s2839 = smul.u32 4, %s16
      $region44: #{global_filter_forward.1} parent=39 // pred_fallthru
        _
    $region40: #{global_filter_forward.1} parent=5 // pred_fallthru
      _
    %p2840 = scmp.le.s32.totalorder 2, %s11
    // Predicated region
    $region45: #{global_filter_forward.1} parent=5 // pred_check
      %p2841 = pneg %p2840
    $region46: #{global_filter_forward.1} parent=5 // pred_check_branch
      %2843 = sbr.rel (%p2841) target = $region48
    $region47: #{global_filter_forward.1} parent=5 // pred_region
      %s2844 = ssub.s32 %s11, 2
      // Predicated region
      $region49: #{global_filter_forward.1} parent=47 // pred_check
        %p2845 = pneg %p150
      $region50: #{global_filter_forward.1} parent=47 // pred_check_branch
        %2847 = sbr.rel (%p2845) target = $region52
      $region51: #{global_filter_forward.1} parent=47 // pred_region
        %s2848 = smul.u32 4, %s17
        %p2849 = scmp.lt.s32.totalorder %s2848, 7
        %s2850 = scalar_select %p2849, %s2848, 7
        %s2851 = smul.addr %s2850, 25
        %s2852 = smul.addr %s2851, 8
        %s2853 = scalar_lea.vmem %s5, %s2852
      $region52: #{global_filter_forward.1} parent=47 // pred_fallthru
        _
    $region48: #{global_filter_forward.1} parent=5 // pred_fallthru
      _
  $region6: #{global_filter_forward.1} parent=0 // loop_footer
    %s15 = sadd.s32 1, %s11
  $region7: #{global_filter_forward.1} parent=0 // loop_footer_branch
    %10 = sbr.rel target = $region3
  $region8: #{global_filter_forward.1} parent=0 // loop_exit
    _

</llo_original>
